<compile_context>
chip_gen: v7x
topology: tpu7x:2x2x1
jax: 0.10.0
libtpu: 0.0.40
codegen_flags: <defaults>
</compile_context>

<pallas_src>
import jax
import jax.numpy as jnp
from jax import lax
from jax.experimental import pallas as pl
from jax.experimental.pallas import tpu as pltpu

# ---- config (small, consistent with the module) ----
BATCH = 2
SEQ = 8
HIDDEN = 32
HEADS = 4
KV_HEADS = 4          # == HEADS
HEAD_DIM = HIDDEN // HEADS
SCALE = HEAD_DIM ** (-0.5)
QKV_BIAS = True


def _self_attention_kernel(x_ref, w_ref, b_ref, out_ref, vis_ref):
    B, S, H, D, NH = BATCH, SEQ, HIDDEN, HEAD_DIM, HEADS

    x = x_ref[...].reshape(B * S, H)          # (B*S, H) — merge leading dims
    w = w_ref[...]                            # (H, 4H): [Wq*scale | Wk | Wv | Wo]
    b = b_ref[...]                            # (1, 4H): [bq*scale | bk | bv | bo]

    # Fused projection over the whole packed weight: single MXU push.
    # Columns: [scale*Q | K | V | (unused x@Wo)] — the trailing H columns are
    # free riders inside the same MXU pass and are simply ignored.
    qkv = jnp.dot(x, w, preferred_element_type=jnp.float32) + b   # (B*S, 4H)

    # ---- per-(batch, head) scores, stacked along sublanes ----
    score_blocks = []
    for bi in range(B):                       # static, unrolled
        r0 = bi * S
        for h in range(NH):                   # static, unrolled
            cq = 0 * H + h * D
            ck = 1 * H + h * D
            qh = qkv[r0:r0 + S, cq:cq + D]    # (S, D), already scaled by SCALE
            kh = qkv[r0:r0 + S, ck:ck + D]    # (S, D)
            # scores = (scale*Q) @ K^T; contraction on the head dim (no transpose).
            score_blocks.append(
                lax.dot_general(qh, kh, (((1,), (1,)), ((), ())),
                                preferred_element_type=jnp.float32))   # (S, S)
    scores = jnp.concatenate(score_blocks, axis=0)        # (B*NH*S, S)

    # ---- one vectorized softmax over all heads and batches ----
    m = jnp.max(scores, axis=-1, keepdims=True)
    e = jnp.exp(scores - m)
    attn = e * pl.reciprocal(jnp.sum(e, axis=-1, keepdims=True))   # exact 1/x

    # Single bulk store of the visualization weights (layout-preserving reshape:
    # sublane dim split at a multiple of the sublane tile).
    vis_ref[...] = attn.reshape(B, NH, S, S)

    # ---- per-head context; concat heads/batches; ONE output projection ----
    ctx_rows = []
    for bi in range(B):
        r0 = bi * S
        head_ctx = []
        for h in range(NH):
            blk = (bi * NH + h) * S
            a = attn[blk:blk + S, :]                      # (S, S) tile-aligned rows
            cv = 2 * H + h * D
            vh = qkv[r0:r0 + S, cv:cv + D]                # (S, D)
            head_ctx.append(
                jnp.dot(a, vh, preferred_element_type=jnp.float32))   # (S, D)
        ctx_rows.append(jnp.concatenate(head_ctx, axis=-1))           # (S, H)
    ctx = jnp.concatenate(ctx_rows, axis=0)                           # (B*S, H)

    wo = w[:, 3 * H:4 * H]
    bo = b[:, 3 * H:4 * H]
    out = jnp.dot(ctx, wo, preferred_element_type=jnp.float32) + bo
    out_ref[...] = out.reshape(B, S, H)


def self_attention(x, wq, bq, wk, bk, wv, bv, wo, bo):
    """x: (B, S, H) f32.  Weights (H, H) in (in, out) layout; biases (1, H)."""
    B, S, H = x.shape
    # Pack all weights / biases; fold the softmax scale into the Q columns.
    w_all = jnp.concatenate([wq * SCALE, wk, wv, wo], axis=1)   # (H, 4H) = (32, 128)
    b_all = jnp.concatenate([bq * SCALE, bk, bv, bo], axis=1)   # (1, 4H) = (1, 128)

    vmem = pl.BlockSpec(memory_space=pltpu.MemorySpace.VMEM)    # whole array in VMEM
    return pl.pallas_call(
        _self_attention_kernel,
        out_shape=(
            jax.ShapeDtypeStruct((B, S, H), jnp.float32),
            jax.ShapeDtypeStruct((B, HEADS, S, S), jnp.float32),
        ),
        in_specs=[vmem, vmem, vmem],
        out_specs=(vmem, vmem),
    )(x, w_all, b_all)


def _reference(x, wq, bq, wk, bk, wv, bv, wo, bo):
    """Plain-JAX mirror of the PyTorch forward (eval mode)."""
    B, S, H = x.shape
    Q = x @ wq + bq
    K = x @ wk + bk
    V = x @ wv + bv
    Q = Q.reshape(B, S, HEADS, HEAD_DIM).transpose(0, 2, 1, 3)
    K = K.reshape(B, S, KV_HEADS, HEAD_DIM).transpose(0, 2, 1, 3)
    V = V.reshape(B, S, KV_HEADS, HEAD_DIM).transpose(0, 2, 1, 3)
    scores = jnp.einsum("bhqd,bhkd->bhqk", Q, K)
    weights = jax.nn.softmax(scores * SCALE, axis=-1)
    out = jnp.einsum("bhqk,bhkd->bhqd", weights, V)
    out = out.transpose(0, 2, 1, 3).reshape(B, S, H)
    out = out @ wo + bo
    return out, weights


if __name__ == "__main__":
    key = jax.random.PRNGKey(0)
    keys = jax.random.split(key, 10)

    x = jax.random.normal(keys[0], (BATCH, SEQ, HIDDEN), jnp.float32)

    def lin_w(k):
        # torch nn.Linear weight is (out, in); store transposed (in, out)
        return 0.02 * jax.random.normal(k, (HIDDEN, HIDDEN), jnp.float32)

    wq = lin_w(keys[1]); wk = lin_w(keys[2]); wv = lin_w(keys[3]); wo = lin_w(keys[4])
    if QKV_BIAS:
        bq = 0.02 * jax.random.normal(keys[5], (1, HIDDEN), jnp.float32)
        bk = 0.02 * jax.random.normal(keys[6], (1, HIDDEN), jnp.float32)
        bv = 0.02 * jax.random.normal(keys[7], (1, HIDDEN), jnp.float32)
    else:
        bq = bk = bv = jnp.zeros((1, HIDDEN), jnp.float32)
    bo = 0.02 * jax.random.normal(keys[8], (1, HIDDEN), jnp.float32)

    out, vis = self_attention(x, wq, bq, wk, bk, wv, bv, wo, bo)
    out = jax.block_until_ready(out)
    vis = jax.block_until_ready(vis)

    ref_out, ref_vis = _reference(x, wq, bq, wk, bk, wv, bv, wo, bo)
    assert out.shape == (BATCH, SEQ, HIDDEN)
    assert vis.shape == (BATCH, HEADS, SEQ, SEQ)
    assert jnp.allclose(out, ref_out, atol=1e-5, rtol=1e-5)
    assert jnp.allclose(vis, ref_vis, atol=1e-5, rtol=1e-5)

    print("KERNEL_OK")
</pallas_src>

<mosaic_0001>
module attributes {stable_mosaic.version = 11 : i64} {
  func.func @_self_attention_kernel(%arg0: memref<2x8x32xf32, #tpu.memory_space<vmem>>, %arg1: memref<32x128xf32, #tpu.memory_space<vmem>>, %arg2: memref<1x128xf32, #tpu.memory_space<vmem>>, %arg3: memref<2x8x32xf32, #tpu.memory_space<vmem>>, %arg4: memref<2x4x8x8xf32, #tpu.memory_space<vmem>>) attributes {dimension_semantics = [], scalar_prefetch = 0 : i64, scratch_operands = 0 : i64, tpu.core_type = #tpu.core_type<tc>} {
    %c0 = arith.constant 0 : index
    %c0_0 = arith.constant 0 : index
    %c0_1 = arith.constant 0 : index
    %0 = vector.load %arg0[%c0, %c0_0, %c0_1] : memref<2x8x32xf32, #tpu.memory_space<vmem>>, vector<2x8x32xf32>
    %1 = vector.shape_cast %0 : vector<2x8x32xf32> to vector<16x32xf32>
    %c0_2 = arith.constant 0 : index
    %c0_3 = arith.constant 0 : index
    %2 = vector.load %arg1[%c0_2, %c0_3] : memref<32x128xf32, #tpu.memory_space<vmem>>, vector<32x128xf32>
    %c0_4 = arith.constant 0 : index
    %c0_5 = arith.constant 0 : index
    %3 = vector.load %arg2[%c0_4, %c0_5] : memref<1x128xf32, #tpu.memory_space<vmem>>, vector<1x128xf32>
    %cst = arith.constant dense<0.000000e+00> : vector<16x128xf32>
    %4 = tpu.matmul %1, %2, %cst {dimension_numbers = #tpu.dot_dimension_numbers<[1], [0], [0], [1], [0, 0, 1, 1], [], []>} : vector<16x32xf32>, vector<32x128xf32>, vector<16x128xf32> -> vector<16x128xf32>
    %5 = vector.broadcast %3 : vector<1x128xf32> to vector<16x128xf32>
    %6 = arith.addf %4, %5 : vector<16x128xf32>
    %7 = vector.extract_strided_slice %6 {offsets = [0, 0], sizes = [8, 8], strides = [1, 1]} : vector<16x128xf32> to vector<8x8xf32>
    %8 = vector.extract_strided_slice %6 {offsets = [0, 32], sizes = [8, 8], strides = [1, 1]} : vector<16x128xf32> to vector<8x8xf32>
    %cst_6 = arith.constant dense<0.000000e+00> : vector<8x8xf32>
    %9 = tpu.matmul %7, %8, %cst_6 {dimension_numbers = #tpu.dot_dimension_numbers<[1], [1], [0], [0], [0, 0, 1, 0], [], []>} : vector<8x8xf32>, vector<8x8xf32>, vector<8x8xf32> -> vector<8x8xf32>
    %10 = vector.extract_strided_slice %6 {offsets = [0, 8], sizes = [8, 8], strides = [1, 1]} : vector<16x128xf32> to vector<8x8xf32>
    %11 = vector.extract_strided_slice %6 {offsets = [0, 40], sizes = [8, 8], strides = [1, 1]} : vector<16x128xf32> to vector<8x8xf32>
    %cst_7 = arith.constant dense<0.000000e+00> : vector<8x8xf32>
    %12 = tpu.matmul %10, %11, %cst_7 {dimension_numbers = #tpu.dot_dimension_numbers<[1], [1], [0], [0], [0, 0, 1, 0], [], []>} : vector<8x8xf32>, vector<8x8xf32>, vector<8x8xf32> -> vector<8x8xf32>
    %13 = vector.extract_strided_slice %6 {offsets = [0, 16], sizes = [8, 8], strides = [1, 1]} : vector<16x128xf32> to vector<8x8xf32>
    %14 = vector.extract_strided_slice %6 {offsets = [0, 48], sizes = [8, 8], strides = [1, 1]} : vector<16x128xf32> to vector<8x8xf32>
    %cst_8 = arith.constant dense<0.000000e+00> : vector<8x8xf32>
    %15 = tpu.matmul %13, %14, %cst_8 {dimension_numbers = #tpu.dot_dimension_numbers<[1], [1], [0], [0], [0, 0, 1, 0], [], []>} : vector<8x8xf32>, vector<8x8xf32>, vector<8x8xf32> -> vector<8x8xf32>
    %16 = vector.extract_strided_slice %6 {offsets = [0, 24], sizes = [8, 8], strides = [1, 1]} : vector<16x128xf32> to vector<8x8xf32>
    %17 = vector.extract_strided_slice %6 {offsets = [0, 56], sizes = [8, 8], strides = [1, 1]} : vector<16x128xf32> to vector<8x8xf32>
    %cst_9 = arith.constant dense<0.000000e+00> : vector<8x8xf32>
    %18 = tpu.matmul %16, %17, %cst_9 {dimension_numbers = #tpu.dot_dimension_numbers<[1], [1], [0], [0], [0, 0, 1, 0], [], []>} : vector<8x8xf32>, vector<8x8xf32>, vector<8x8xf32> -> vector<8x8xf32>
    %19 = vector.extract_strided_slice %6 {offsets = [8, 0], sizes = [8, 8], strides = [1, 1]} : vector<16x128xf32> to vector<8x8xf32>
    %20 = vector.extract_strided_slice %6 {offsets = [8, 32], sizes = [8, 8], strides = [1, 1]} : vector<16x128xf32> to vector<8x8xf32>
    %cst_10 = arith.constant dense<0.000000e+00> : vector<8x8xf32>
    %21 = tpu.matmul %19, %20, %cst_10 {dimension_numbers = #tpu.dot_dimension_numbers<[1], [1], [0], [0], [0, 0, 1, 0], [], []>} : vector<8x8xf32>, vector<8x8xf32>, vector<8x8xf32> -> vector<8x8xf32>
    %22 = vector.extract_strided_slice %6 {offsets = [8, 8], sizes = [8, 8], strides = [1, 1]} : vector<16x128xf32> to vector<8x8xf32>
    %23 = vector.extract_strided_slice %6 {offsets = [8, 40], sizes = [8, 8], strides = [1, 1]} : vector<16x128xf32> to vector<8x8xf32>
    %cst_11 = arith.constant dense<0.000000e+00> : vector<8x8xf32>
    %24 = tpu.matmul %22, %23, %cst_11 {dimension_numbers = #tpu.dot_dimension_numbers<[1], [1], [0], [0], [0, 0, 1, 0], [], []>} : vector<8x8xf32>, vector<8x8xf32>, vector<8x8xf32> -> vector<8x8xf32>
    %25 = vector.extract_strided_slice %6 {offsets = [8, 16], sizes = [8, 8], strides = [1, 1]} : vector<16x128xf32> to vector<8x8xf32>
    %26 = vector.extract_strided_slice %6 {offsets = [8, 48], sizes = [8, 8], strides = [1, 1]} : vector<16x128xf32> to vector<8x8xf32>
    %cst_12 = arith.constant dense<0.000000e+00> : vector<8x8xf32>
    %27 = tpu.matmul %25, %26, %cst_12 {dimension_numbers = #tpu.dot_dimension_numbers<[1], [1], [0], [0], [0, 0, 1, 0], [], []>} : vector<8x8xf32>, vector<8x8xf32>, vector<8x8xf32> -> vector<8x8xf32>
    %28 = vector.extract_strided_slice %6 {offsets = [8, 24], sizes = [8, 8], strides = [1, 1]} : vector<16x128xf32> to vector<8x8xf32>
    %29 = vector.extract_strided_slice %6 {offsets = [8, 56], sizes = [8, 8], strides = [1, 1]} : vector<16x128xf32> to vector<8x8xf32>
    %cst_13 = arith.constant dense<0.000000e+00> : vector<8x8xf32>
    %30 = tpu.matmul %28, %29, %cst_13 {dimension_numbers = #tpu.dot_dimension_numbers<[1], [1], [0], [0], [0, 0, 1, 0], [], []>} : vector<8x8xf32>, vector<8x8xf32>, vector<8x8xf32> -> vector<8x8xf32>
    %31 = tpu.concatenate %9, %12, %15, %18, %21, %24, %27, %30 in 0 : vector<8x8xf32>, vector<8x8xf32>, vector<8x8xf32>, vector<8x8xf32>, vector<8x8xf32>, vector<8x8xf32>, vector<8x8xf32>, vector<8x8xf32> -> vector<64x8xf32>
    %cst_14 = arith.constant dense<0xFF800000> : vector<64xf32>
    %32 = vector.multi_reduction <maximumf>, %31, %cst_14 [1] : vector<64x8xf32> to vector<64xf32>
    %33 = vector.shape_cast %32 : vector<64xf32> to vector<64x1xf32>
    %34 = vector.broadcast %33 : vector<64x1xf32> to vector<64x8xf32>
    %35 = arith.subf %31, %34 : vector<64x8xf32>
    %36 = math.exp %35 : vector<64x8xf32>
    %cst_15 = arith.constant dense<0.000000e+00> : vector<64xf32>
    %37 = vector.multi_reduction <add>, %36, %cst_15 [1] : vector<64x8xf32> to vector<64xf32>
    %38 = vector.shape_cast %37 : vector<64xf32> to vector<64x1xf32>
    %39 = tpu.reciprocal %38 : vector<64x1xf32> -> vector<64x1xf32>
    %40 = vector.broadcast %39 : vector<64x1xf32> to vector<64x8xf32>
    %41 = arith.mulf %36, %40 : vector<64x8xf32>
    %42 = vector.shape_cast %41 : vector<64x8xf32> to vector<2x4x8x8xf32>
    %c0_16 = arith.constant 0 : index
    %c0_17 = arith.constant 0 : index
    %c0_18 = arith.constant 0 : index
    %c0_19 = arith.constant 0 : index
    %43 = vector.load %arg4[%c0_16, %c0_17, %c0_18, %c0_19] : memref<2x4x8x8xf32, #tpu.memory_space<vmem>>, vector<2x4x8x8xf32>
    tpu.vector_store %arg4[%c0_16, %c0_17, %c0_18, %c0_19], %42 {strides = array<i32>} : memref<2x4x8x8xf32, #tpu.memory_space<vmem>>, vector<2x4x8x8xf32>,
    %44 = vector.extract_strided_slice %41 {offsets = [0, 0], sizes = [8, 8], strides = [1, 1]} : vector<64x8xf32> to vector<8x8xf32>
    %45 = vector.extract_strided_slice %6 {offsets = [0, 64], sizes = [8, 8], strides = [1, 1]} : vector<16x128xf32> to vector<8x8xf32>
    %cst_20 = arith.constant dense<0.000000e+00> : vector<8x8xf32>
    %46 = tpu.matmul %44, %45, %cst_20 {dimension_numbers = #tpu.dot_dimension_numbers<[1], [0], [0], [1], [0, 0, 1, 1], [], []>} : vector<8x8xf32>, vector<8x8xf32>, vector<8x8xf32> -> vector<8x8xf32>
    %47 = vector.extract_strided_slice %41 {offsets = [8, 0], sizes = [8, 8], strides = [1, 1]} : vector<64x8xf32> to vector<8x8xf32>
    %48 = vector.extract_strided_slice %6 {offsets = [0, 72], sizes = [8, 8], strides = [1, 1]} : vector<16x128xf32> to vector<8x8xf32>
    %cst_21 = arith.constant dense<0.000000e+00> : vector<8x8xf32>
    %49 = tpu.matmul %47, %48, %cst_21 {dimension_numbers = #tpu.dot_dimension_numbers<[1], [0], [0], [1], [0, 0, 1, 1], [], []>} : vector<8x8xf32>, vector<8x8xf32>, vector<8x8xf32> -> vector<8x8xf32>
    %50 = vector.extract_strided_slice %41 {offsets = [16, 0], sizes = [8, 8], strides = [1, 1]} : vector<64x8xf32> to vector<8x8xf32>
    %51 = vector.extract_strided_slice %6 {offsets = [0, 80], sizes = [8, 8], strides = [1, 1]} : vector<16x128xf32> to vector<8x8xf32>
    %cst_22 = arith.constant dense<0.000000e+00> : vector<8x8xf32>
    %52 = tpu.matmul %50, %51, %cst_22 {dimension_numbers = #tpu.dot_dimension_numbers<[1], [0], [0], [1], [0, 0, 1, 1], [], []>} : vector<8x8xf32>, vector<8x8xf32>, vector<8x8xf32> -> vector<8x8xf32>
    %53 = vector.extract_strided_slice %41 {offsets = [24, 0], sizes = [8, 8], strides = [1, 1]} : vector<64x8xf32> to vector<8x8xf32>
    %54 = vector.extract_strided_slice %6 {offsets = [0, 88], sizes = [8, 8], strides = [1, 1]} : vector<16x128xf32> to vector<8x8xf32>
    %cst_23 = arith.constant dense<0.000000e+00> : vector<8x8xf32>
    %55 = tpu.matmul %53, %54, %cst_23 {dimension_numbers = #tpu.dot_dimension_numbers<[1], [0], [0], [1], [0, 0, 1, 1], [], []>} : vector<8x8xf32>, vector<8x8xf32>, vector<8x8xf32> -> vector<8x8xf32>
    %56 = tpu.concatenate %46, %49, %52, %55 in 1 : vector<8x8xf32>, vector<8x8xf32>, vector<8x8xf32>, vector<8x8xf32> -> vector<8x32xf32>
    %57 = vector.extract_strided_slice %41 {offsets = [32, 0], sizes = [8, 8], strides = [1, 1]} : vector<64x8xf32> to vector<8x8xf32>
    %58 = vector.extract_strided_slice %6 {offsets = [8, 64], sizes = [8, 8], strides = [1, 1]} : vector<16x128xf32> to vector<8x8xf32>
    %cst_24 = arith.constant dense<0.000000e+00> : vector<8x8xf32>
    %59 = tpu.matmul %57, %58, %cst_24 {dimension_numbers = #tpu.dot_dimension_numbers<[1], [0], [0], [1], [0, 0, 1, 1], [], []>} : vector<8x8xf32>, vector<8x8xf32>, vector<8x8xf32> -> vector<8x8xf32>
    %60 = vector.extract_strided_slice %41 {offsets = [40, 0], sizes = [8, 8], strides = [1, 1]} : vector<64x8xf32> to vector<8x8xf32>
    %61 = vector.extract_strided_slice %6 {offsets = [8, 72], sizes = [8, 8], strides = [1, 1]} : vector<16x128xf32> to vector<8x8xf32>
    %cst_25 = arith.constant dense<0.000000e+00> : vector<8x8xf32>
    %62 = tpu.matmul %60, %61, %cst_25 {dimension_numbers = #tpu.dot_dimension_numbers<[1], [0], [0], [1], [0, 0, 1, 1], [], []>} : vector<8x8xf32>, vector<8x8xf32>, vector<8x8xf32> -> vector<8x8xf32>
    %63 = vector.extract_strided_slice %41 {offsets = [48, 0], sizes = [8, 8], strides = [1, 1]} : vector<64x8xf32> to vector<8x8xf32>
    %64 = vector.extract_strided_slice %6 {offsets = [8, 80], sizes = [8, 8], strides = [1, 1]} : vector<16x128xf32> to vector<8x8xf32>
    %cst_26 = arith.constant dense<0.000000e+00> : vector<8x8xf32>
    %65 = tpu.matmul %63, %64, %cst_26 {dimension_numbers = #tpu.dot_dimension_numbers<[1], [0], [0], [1], [0, 0, 1, 1], [], []>} : vector<8x8xf32>, vector<8x8xf32>, vector<8x8xf32> -> vector<8x8xf32>
    %66 = vector.extract_strided_slice %41 {offsets = [56, 0], sizes = [8, 8], strides = [1, 1]} : vector<64x8xf32> to vector<8x8xf32>
    %67 = vector.extract_strided_slice %6 {offsets = [8, 88], sizes = [8, 8], strides = [1, 1]} : vector<16x128xf32> to vector<8x8xf32>
    %cst_27 = arith.constant dense<0.000000e+00> : vector<8x8xf32>
    %68 = tpu.matmul %66, %67, %cst_27 {dimension_numbers = #tpu.dot_dimension_numbers<[1], [0], [0], [1], [0, 0, 1, 1], [], []>} : vector<8x8xf32>, vector<8x8xf32>, vector<8x8xf32> -> vector<8x8xf32>
    %69 = tpu.concatenate %59, %62, %65, %68 in 1 : vector<8x8xf32>, vector<8x8xf32>, vector<8x8xf32>, vector<8x8xf32> -> vector<8x32xf32>
    %70 = tpu.concatenate %56, %69 in 0 : vector<8x32xf32>, vector<8x32xf32> -> vector<16x32xf32>
    %71 = vector.extract_strided_slice %2 {offsets = [0, 96], sizes = [32, 32], strides = [1, 1]} : vector<32x128xf32> to vector<32x32xf32>
    %72 = vector.extract_strided_slice %3 {offsets = [0, 96], sizes = [1, 32], strides = [1, 1]} : vector<1x128xf32> to vector<1x32xf32>
    %cst_28 = arith.constant dense<0.000000e+00> : vector<16x32xf32>
    %73 = tpu.matmul %70, %71, %cst_28 {dimension_numbers = #tpu.dot_dimension_numbers<[1], [0], [0], [1], [0, 0, 1, 1], [], []>} : vector<16x32xf32>, vector<32x32xf32>, vector<16x32xf32> -> vector<16x32xf32>
    %74 = vector.broadcast %72 : vector<1x32xf32> to vector<16x32xf32>
    %75 = arith.addf %73, %74 : vector<16x32xf32>
    %76 = vector.shape_cast %75 : vector<16x32xf32> to vector<2x8x32xf32>
    %c0_29 = arith.constant 0 : index
    %c0_30 = arith.constant 0 : index
    %c0_31 = arith.constant 0 : index
    %77 = vector.load %arg3[%c0_29, %c0_30, %c0_31] : memref<2x8x32xf32, #tpu.memory_space<vmem>>, vector<2x8x32xf32>
    tpu.vector_store %arg3[%c0_29, %c0_30, %c0_31], %76 {strides = array<i32>} : memref<2x8x32xf32, #tpu.memory_space<vmem>>, vector<2x8x32xf32>,
    return
  }
}

</mosaic_0001>

<llo_original>
// kernel: tpu_custom_call.1
$region0: #{tpu_custom_call.1}
  #allocation0 [shape = 'u32[]', space=smem, size = 0x4, offset = 0x4, fixed_abs, tag = 'smem constant byte address 0x4 - core index']
  #allocation1 [shape = 'u32[144,128]{1,0:T(1,128)}', space=vmem, size = 0x12000, scoped, tag = 'internal scratch']
  %s0 = inlined_call_operand.hbm [shape: f32[2,8,32], index: 0, kind: input, shape index: {}]
  %s1 = inlined_call_operand.hbm [shape: f32[32,128], index: 1, kind: input, shape index: {}]
  %s2 = inlined_call_operand.vmem [shape: f32[1,128], index: 2, kind: input, shape index: {}]
  %s3 = inlined_call_operand.hbm [shape: f32[2,8,32], index: 3, kind: output, shape index: {0}]
  %s4 = inlined_call_operand.hbm [shape: f32[2,4,8,8], index: 4, kind: output, shape index: {1}]
  %5 = xla_tuple %s3, %s4
  %s6 = sld [smem:[#allocation0]]
  $region38: #{tpu_custom_call.1} parent=0
    _
  %s8 = ssub.s32 1, %s6
  %s9 = scalar_select 0, %s8, %s6
  $region1: #{tpu_custom_call.1} parent=0
    #allocation2 [shape = 'u8[8192]{0}', space=vmem, size = 0x2000, scoped, tag = 'input window, operand 0, single buffered']
    #allocation3 [shape = 's32[1]{0}', space=sflag, size = 0x4, scoped, tag = 'scoped memory for tpu_custom_call.1']
    #allocation4 [shape = 's32[1]{0}', space=sflag, size = 0x4, scoped, tag = 'scoped memory for tpu_custom_call.1']
    #allocation5 [shape = 'u8[16384]{0}', space=vmem, size = 0x4000, scoped, tag = 'input window, operand 1, single buffered']
    #allocation6 [shape = 's32[1]{0}', space=sflag, size = 0x4, scoped, tag = 'scoped memory for tpu_custom_call.1']
    #allocation7 [shape = 'u8[8192]{0}', space=vmem, size = 0x2000, scoped, tag = 'output window, operand 0, single buffered']
    #allocation8 [shape = 'u8[32768]{0}', space=vmem, size = 0x8000, scoped, tag = 'output window, operand 1, single buffered']
    #allocation9 [shape = 's32[1]{0}', space=sflag, size = 0x4, scoped, tag = 'scoped memory for tpu_custom_call.1']
    %10 = vsyncpa [#allocation3], 0
    %11 = vsyncpa [#allocation6], 0
    %12 = vsyncpa [#allocation4], 0
    %13 = vsyncpa [#allocation9], 0
    // Predicated region
    $region2: #{tpu_custom_call.1} parent=1 // pred_check
      _
    $region3: #{tpu_custom_call.1} parent=1 // pred_check_branch
      %15 = sbr.rel (0) target = $region5
    $region4: #{tpu_custom_call.1} parent=1 // pred_region
      %s17 = ssub.s32 256, 256
      %18 = vsyncadd [#allocation3], %s17
      %s19 = sshll.u32 [#allocation2], 4
      %s20 = int_to_ptr.vmem [resolvable:$true] %s19
      %25 = dma.hbm_to_vmem [thread:$0]  %s0, 256, %s20, [#allocation3], 128, 128, 8
    $region5: #{tpu_custom_call.1} parent=1 // pred_fallthru
      _
    // Predicated region
    $region6: #{tpu_custom_call.1} parent=1 // pred_check
      _
    $region7: #{tpu_custom_call.1} parent=1 // pred_check_branch
      %27 = sbr.rel (0) target = $region9
    $region8: #{tpu_custom_call.1} parent=1 // pred_region
      %s29 = ssub.s32 512, 512
      %30 = vsyncadd [#allocation6], %s29
      %s31 = sshll.u32 [#allocation5], 4
      %s32 = int_to_ptr.vmem [resolvable:$true] %s31
      %37 = dma.hbm_to_vmem [thread:$0]  %s1, 512, %s32, [#allocation6], 128, 128, 8
    $region9: #{tpu_custom_call.1} parent=1 // pred_fallthru
      _
    // Predicated region
    $region10: #{tpu_custom_call.1} parent=1 // pred_check
      _
    $region11: #{tpu_custom_call.1} parent=1 // pred_check_branch
      %39 = sbr.rel (0) target = $region13
    $region12: #{tpu_custom_call.1} parent=1 // pred_region
      _
    $region13: #{tpu_custom_call.1} parent=1 // pred_fallthru
      _
    // Predicated region
    $region14: #{tpu_custom_call.1} parent=1 // pred_check
      _
    $region15: #{tpu_custom_call.1} parent=1 // pred_check_branch
      %41 = sbr.rel (0) target = $region17
    $region16: #{tpu_custom_call.1} parent=1 // pred_region
      %42 = dma.done [#allocation3], 256
    $region17: #{tpu_custom_call.1} parent=1 // pred_fallthru
      _
    // Predicated region
    $region18: #{tpu_custom_call.1} parent=1 // pred_check
      _
    $region19: #{tpu_custom_call.1} parent=1 // pred_check_branch
      %44 = sbr.rel (0) target = $region21
    $region20: #{tpu_custom_call.1} parent=1 // pred_region
      %45 = dma.done [#allocation6], 512
    $region21: #{tpu_custom_call.1} parent=1 // pred_fallthru
      _
    %v46 = vld [vmem:[#allocation2] sm:$0xff]
    %v47 = vld [vmem:[#allocation2 + $0x8] sm:$0xff]
    %v48 = vld [vmem:[#allocation5] sm:$0xff]
    %v49 = vld [vmem:[#allocation5 + $0x8] sm:$0xff]
    %v50 = vld [vmem:[#allocation5 + $0x10] sm:$0xff]
    %v51 = vld [vmem:[#allocation5 + $0x18] sm:$0xff]
    %v52 = vld [vmem:[%s2] sm:$0x1]
    %v54 = vlaneseq
    %v55 = vshrl.u32 %v54, 7
    %v56 = vsub.s32 0, %v55
    %v57 = vrot.slane %v52, %v56
    %vm59 = vcmask 261120
    %v61 = vsel %vm59, %v46, 0
    %v64 = vsel %vm59, %v47, 0
    %66 = vmatprep.subr.mxu0 0.0
    %67 = vmatpush1.msra.mxu0 %v48
    %68 = vmatprep.subr.mxu0 0.0
    %69 = vmatpush1.msra.mxu0 %v49
    %70 = vmatprep.subr.mxu0 0.0
    %71 = vmatpush1.msra.mxu0 %v50
    %72 = vmatprep.subr.mxu0 0.0
    %73 = vmatpush1.msra.mxu0 %v51
    %74 = vmatprep.subr.mxu0 0.0
    %75 = vmatpush1.msra.mxu0 0.0
    %76 = vmatprep.subr.mxu0 0.0
    %77 = vmatpush1.msra.mxu0 0.0
    %78 = vmatprep.subr.mxu0 0.0
    %79 = vmatpush1.msra.mxu0 0.0
    %80 = vmatprep.subr.mxu0 0.0
    %81 = vmatpush1.msra.mxu0 0.0
    %82 = vmatprep.subr.mxu0 0.0
    %83 = vmatpush1.msra.mxu0 0.0
    %84 = vmatprep.subr.mxu0 0.0
    %85 = vmatpush1.msra.mxu0 0.0
    %86 = vmatprep.subr.mxu0 0.0
    %87 = vmatpush1.msra.mxu0 0.0
    %88 = vmatprep.subr.mxu0 0.0
    %89 = vmatpush1.msra.mxu0 0.0
    %90 = vmatprep.subr.mxu0 0.0
    %91 = vmatpush1.msra.mxu0 0.0
    %92 = vmatprep.subr.mxu0 0.0
    %93 = vmatpush1.msra.mxu0 0.0
    %94 = vmatprep.subr.mxu0 0.0
    %95 = vmatpush1.msra.mxu0 0.0
    %96 = vmatprep.subr.mxu0 0.0
    %97 = vmatpush1.msra.mxu0 0.0
    %98 = vmatprep.subr.mxu0 0.0
    %99 = vmatpush1.msra.mxu0 0.0
    %100 = vmatprep.subr.mxu0 0.0
    %101 = vmatpush1.msra.mxu0 0.0
    %102 = vmatprep.subr.mxu0 0.0
    %103 = vmatpush1.msra.mxu0 0.0
    %104 = vmatprep.subr.mxu0 0.0
    %105 = vmatpush1.msra.mxu0 0.0
    %106 = vmatprep.subr.mxu0 0.0
    %107 = vmatpush1.msra.mxu0 0.0
    %108 = vmatprep.subr.mxu0 0.0
    %109 = vmatpush1.msra.mxu0 0.0
    %110 = vmatprep.subr.mxu0 0.0
    %111 = vmatpush1.msra.mxu0 0.0
    %112 = vmatprep.subr.mxu0 0.0
    %113 = vmatpush1.msra.mxu0 0.0
    %114 = vmatprep.subr.mxu0 0.0
    %115 = vmatpush1.msra.mxu0 0.0
    %116 = vmatprep.subr.mxu0 0.0
    %117 = vmatpush1.msra.mxu0 0.0
    %118 = vmatprep.subr.mxu0 0.0
    %119 = vmatpush1.msra.mxu0 0.0
    %120 = vmatprep.subr.mxu0 0.0
    %121 = vmatpush1.msra.mxu0 0.0
    %122 = vmatprep.subr.mxu0 0.0
    %123 = vmatpush1.msra.mxu0 0.0
    %124 = vmatprep.subr.mxu0 0.0
    %125 = vmatpush1.msra.mxu0 0.0
    %126 = vmatprep.subr.mxu0 0.0
    %127 = vmatpush1.msra.mxu0 0.0
    %128 = vmatprep.subr.mxu0 0.0
    %129 = vmatpush1.msra.mxu0 0.0
    %130 = vmatprep.mubr.f32.mxu0 0.0
    %131 = vmatmul.mubr.f32.gmra.mrb[0].mxu0 %v61
    %v132 = vpop.f32.mrb[0].mxu0
    %v133 = vadd.f32 %v57, %v132
    %v134 = vpop.f32.mrb[0].mxu0
    %135 = vmatprep.mubr.f32.mxu0 0.0
    %136 = vmatmul.mubr.f32.gmra.mrb[0].mxu0 %v64
    %v137 = vpop.f32.mrb[0].mxu0
    %v138 = vadd.f32 %v57, %v137
    %v139 = vpop.f32.mrb[0].mxu0
    %140 = vdwg.mxu0
    %142 = vrot.lane.b32.xlu0 %v133, 96
    %v143 = vpop.permute.xlu0 %142
    %vm144 = vcmask 64512
    %v145 = vsel %vm144, %v133, 0
    %v147 = vsel %vm144, %v143, 0
    %149 = vmatprep.subr.mxu0 0.0
    %150 = vmatpush1.xpose.msra.mxu0 %v147
    %151 = vmatprep.subr.mxu0 0.0
    %152 = vmatpush1.xpose.msra.mxu0 0.0
    %153 = vmatprep.subr.mxu0 0.0
    %154 = vmatpush1.xpose.msra.mxu0 0.0
    %155 = vmatprep.subr.mxu0 0.0
    %156 = vmatpush1.xpose.msra.mxu0 0.0
    %157 = vmatprep.subr.mxu0 0.0
    %158 = vmatpush1.xpose.msra.mxu0 0.0
    %159 = vmatprep.subr.mxu0 0.0
    %160 = vmatpush1.xpose.msra.mxu0 0.0
    %161 = vmatprep.subr.mxu0 0.0
    %162 = vmatpush1.xpose.msra.mxu0 0.0
    %163 = vmatprep.subr.mxu0 0.0
    %164 = vmatpush1.xpose.msra.mxu0 0.0
    %165 = vmatprep.subr.mxu0 0.0
    %166 = vmatpush1.xpose.msra.mxu0 0.0
    %167 = vmatprep.subr.mxu0 0.0
    %168 = vmatpush1.xpose.msra.mxu0 0.0
    %169 = vmatprep.subr.mxu0 0.0
    %170 = vmatpush1.xpose.msra.mxu0 0.0
    %171 = vmatprep.subr.mxu0 0.0
    %172 = vmatpush1.xpose.msra.mxu0 0.0
    %173 = vmatprep.subr.mxu0 0.0
    %174 = vmatpush1.xpose.msra.mxu0 0.0
    %175 = vmatprep.subr.mxu0 0.0
    %176 = vmatpush1.xpose.msra.mxu0 0.0
    %177 = vmatprep.subr.mxu0 0.0
    %178 = vmatpush1.xpose.msra.mxu0 0.0
    %179 = vmatprep.subr.mxu0 0.0
    %180 = vmatpush1.xpose.msra.mxu0 0.0
    %181 = vmatprep.subr.mxu0 0.0
    %182 = vmatpush1.xpose.msra.mxu0 0.0
    %183 = vmatprep.subr.mxu0 0.0
    %184 = vmatpush1.xpose.msra.mxu0 0.0
    %185 = vmatprep.subr.mxu0 0.0
    %186 = vmatpush1.xpose.msra.mxu0 0.0
    %187 = vmatprep.subr.mxu0 0.0
    %188 = vmatpush1.xpose.msra.mxu0 0.0
    %189 = vmatprep.subr.mxu0 0.0
    %190 = vmatpush1.xpose.msra.mxu0 0.0
    %191 = vmatprep.subr.mxu0 0.0
    %192 = vmatpush1.xpose.msra.mxu0 0.0
    %193 = vmatprep.subr.mxu0 0.0
    %194 = vmatpush1.xpose.msra.mxu0 0.0
    %195 = vmatprep.subr.mxu0 0.0
    %196 = vmatpush1.xpose.msra.mxu0 0.0
    %197 = vmatprep.subr.mxu0 0.0
    %198 = vmatpush1.xpose.msra.mxu0 0.0
    %199 = vmatprep.subr.mxu0 0.0
    %200 = vmatpush1.xpose.msra.mxu0 0.0
    %201 = vmatprep.subr.mxu0 0.0
    %202 = vmatpush1.xpose.msra.mxu0 0.0
    %203 = vmatprep.subr.mxu0 0.0
    %204 = vmatpush1.xpose.msra.mxu0 0.0
    %205 = vmatprep.subr.mxu0 0.0
    %206 = vmatpush1.xpose.msra.mxu0 0.0
    %207 = vmatprep.subr.mxu0 0.0
    %208 = vmatpush1.xpose.msra.mxu0 0.0
    %209 = vmatprep.subr.mxu0 0.0
    %210 = vmatpush1.xpose.msra.mxu0 0.0
    %211 = vmatprep.subr.mxu0 0.0
    %212 = vmatpush1.xpose.msra.mxu0 0.0
    %213 = vmatprep.mubr.f32.mxu0 0.0
    %214 = vmatmul.mubr.f32.gmra.mrb[0].mxu0 %v145
    %v215 = vpop.f32.mrb[0].mxu0
    %v216 = vadd.f32 0.0, %v215
    %v217 = vpop.f32.mrb[0].mxu0
    %218 = vdwg.mxu0
    %219 = vrot.lane.b32.xlu0 %v133, 120
    %v220 = vpop.permute.xlu0 %219
    %221 = vrot.lane.b32.xlu0 %v133, 88
    %v222 = vpop.permute.xlu0 %221
    %v223 = vsel %vm144, %v220, 0
    %v225 = vsel %vm144, %v222, 0
    %227 = vmatprep.subr.mxu0 0.0
    %228 = vmatpush1.xpose.msra.mxu0 %v225
    %229 = vmatprep.subr.mxu0 0.0
    %230 = vmatpush1.xpose.msra.mxu0 0.0
    %231 = vmatprep.subr.mxu0 0.0
    %232 = vmatpush1.xpose.msra.mxu0 0.0
    %233 = vmatprep.subr.mxu0 0.0
    %234 = vmatpush1.xpose.msra.mxu0 0.0
    %235 = vmatprep.subr.mxu0 0.0
    %236 = vmatpush1.xpose.msra.mxu0 0.0
    %237 = vmatprep.subr.mxu0 0.0
    %238 = vmatpush1.xpose.msra.mxu0 0.0
    %239 = vmatprep.subr.mxu0 0.0
    %240 = vmatpush1.xpose.msra.mxu0 0.0
    %241 = vmatprep.subr.mxu0 0.0
    %242 = vmatpush1.xpose.msra.mxu0 0.0
    %243 = vmatprep.subr.mxu0 0.0
    %244 = vmatpush1.xpose.msra.mxu0 0.0
    %245 = vmatprep.subr.mxu0 0.0
    %246 = vmatpush1.xpose.msra.mxu0 0.0
    %247 = vmatprep.subr.mxu0 0.0
    %248 = vmatpush1.xpose.msra.mxu0 0.0
    %249 = vmatprep.subr.mxu0 0.0
    %250 = vmatpush1.xpose.msra.mxu0 0.0
    %251 = vmatprep.subr.mxu0 0.0
    %252 = vmatpush1.xpose.msra.mxu0 0.0
    %253 = vmatprep.subr.mxu0 0.0
    %254 = vmatpush1.xpose.msra.mxu0 0.0
    %255 = vmatprep.subr.mxu0 0.0
    %256 = vmatpush1.xpose.msra.mxu0 0.0
    %257 = vmatprep.subr.mxu0 0.0
    %258 = vmatpush1.xpose.msra.mxu0 0.0
    %259 = vmatprep.subr.mxu0 0.0
    %260 = vmatpush1.xpose.msra.mxu0 0.0
    %261 = vmatprep.subr.mxu0 0.0
    %262 = vmatpush1.xpose.msra.mxu0 0.0
    %263 = vmatprep.subr.mxu0 0.0
    %264 = vmatpush1.xpose.msra.mxu0 0.0
    %265 = vmatprep.subr.mxu0 0.0
    %266 = vmatpush1.xpose.msra.mxu0 0.0
    %267 = vmatprep.subr.mxu0 0.0
    %268 = vmatpush1.xpose.msra.mxu0 0.0
    %269 = vmatprep.subr.mxu0 0.0
    %270 = vmatpush1.xpose.msra.mxu0 0.0
    %271 = vmatprep.subr.mxu0 0.0
    %272 = vmatpush1.xpose.msra.mxu0 0.0
    %273 = vmatprep.subr.mxu0 0.0
    %274 = vmatpush1.xpose.msra.mxu0 0.0
    %275 = vmatprep.subr.mxu0 0.0
    %276 = vmatpush1.xpose.msra.mxu0 0.0
    %277 = vmatprep.subr.mxu0 0.0
    %278 = vmatpush1.xpose.msra.mxu0 0.0
    %279 = vmatprep.subr.mxu0 0.0
    %280 = vmatpush1.xpose.msra.mxu0 0.0
    %281 = vmatprep.subr.mxu0 0.0
    %282 = vmatpush1.xpose.msra.mxu0 0.0
    %283 = vmatprep.subr.mxu0 0.0
    %284 = vmatpush1.xpose.msra.mxu0 0.0
    %285 = vmatprep.subr.mxu0 0.0
    %286 = vmatpush1.xpose.msra.mxu0 0.0
    %287 = vmatprep.subr.mxu0 0.0
    %288 = vmatpush1.xpose.msra.mxu0 0.0
    %289 = vmatprep.subr.mxu0 0.0
    %290 = vmatpush1.xpose.msra.mxu0 0.0
    %291 = vmatprep.mubr.f32.mxu0 0.0
    %292 = vmatmul.mubr.f32.gmra.mrb[0].mxu0 %v223
    %v293 = vpop.f32.mrb[0].mxu0
    %v294 = vadd.f32 0.0, %v293
    %v295 = vpop.f32.mrb[0].mxu0
    %296 = vdwg.mxu0
    %297 = vrot.lane.b32.xlu0 %v133, 112
    %v298 = vpop.permute.xlu0 %297
    %299 = vrot.lane.b32.xlu0 %v133, 80
    %v300 = vpop.permute.xlu0 %299
    %v301 = vsel %vm144, %v298, 0
    %v303 = vsel %vm144, %v300, 0
    %305 = vmatprep.subr.mxu0 0.0
    %306 = vmatpush1.xpose.msra.mxu0 %v303
    %307 = vmatprep.subr.mxu0 0.0
    %308 = vmatpush1.xpose.msra.mxu0 0.0
    %309 = vmatprep.subr.mxu0 0.0
    %310 = vmatpush1.xpose.msra.mxu0 0.0
    %311 = vmatprep.subr.mxu0 0.0
    %312 = vmatpush1.xpose.msra.mxu0 0.0
    %313 = vmatprep.subr.mxu0 0.0
    %314 = vmatpush1.xpose.msra.mxu0 0.0
    %315 = vmatprep.subr.mxu0 0.0
    %316 = vmatpush1.xpose.msra.mxu0 0.0
    %317 = vmatprep.subr.mxu0 0.0
    %318 = vmatpush1.xpose.msra.mxu0 0.0
    %319 = vmatprep.subr.mxu0 0.0
    %320 = vmatpush1.xpose.msra.mxu0 0.0
    %321 = vmatprep.subr.mxu0 0.0
    %322 = vmatpush1.xpose.msra.mxu0 0.0
    %323 = vmatprep.subr.mxu0 0.0
    %324 = vmatpush1.xpose.msra.mxu0 0.0
    %325 = vmatprep.subr.mxu0 0.0
    %326 = vmatpush1.xpose.msra.mxu0 0.0
    %327 = vmatprep.subr.mxu0 0.0
    %328 = vmatpush1.xpose.msra.mxu0 0.0
    %329 = vmatprep.subr.mxu0 0.0
    %330 = vmatpush1.xpose.msra.mxu0 0.0
    %331 = vmatprep.subr.mxu0 0.0
    %332 = vmatpush1.xpose.msra.mxu0 0.0
    %333 = vmatprep.subr.mxu0 0.0
    %334 = vmatpush1.xpose.msra.mxu0 0.0
    %335 = vmatprep.subr.mxu0 0.0
    %336 = vmatpush1.xpose.msra.mxu0 0.0
    %337 = vmatprep.subr.mxu0 0.0
    %338 = vmatpush1.xpose.msra.mxu0 0.0
    %339 = vmatprep.subr.mxu0 0.0
    %340 = vmatpush1.xpose.msra.mxu0 0.0
    %341 = vmatprep.subr.mxu0 0.0
    %342 = vmatpush1.xpose.msra.mxu0 0.0
    %343 = vmatprep.subr.mxu0 0.0
    %344 = vmatpush1.xpose.msra.mxu0 0.0
    %345 = vmatprep.subr.mxu0 0.0
    %346 = vmatpush1.xpose.msra.mxu0 0.0
    %347 = vmatprep.subr.mxu0 0.0
    %348 = vmatpush1.xpose.msra.mxu0 0.0
    %349 = vmatprep.subr.mxu0 0.0
    %350 = vmatpush1.xpose.msra.mxu0 0.0
    %351 = vmatprep.subr.mxu0 0.0
    %352 = vmatpush1.xpose.msra.mxu0 0.0
    %353 = vmatprep.subr.mxu0 0.0
    %354 = vmatpush1.xpose.msra.mxu0 0.0
    %355 = vmatprep.subr.mxu0 0.0
    %356 = vmatpush1.xpose.msra.mxu0 0.0
    %357 = vmatprep.subr.mxu0 0.0
    %358 = vmatpush1.xpose.msra.mxu0 0.0
    %359 = vmatprep.subr.mxu0 0.0
    %360 = vmatpush1.xpose.msra.mxu0 0.0
    %361 = vmatprep.subr.mxu0 0.0
    %362 = vmatpush1.xpose.msra.mxu0 0.0
    %363 = vmatprep.subr.mxu0 0.0
    %364 = vmatpush1.xpose.msra.mxu0 0.0
    %365 = vmatprep.subr.mxu0 0.0
    %366 = vmatpush1.xpose.msra.mxu0 0.0
    %367 = vmatprep.subr.mxu0 0.0
    %368 = vmatpush1.xpose.msra.mxu0 0.0
    %369 = vmatprep.mubr.f32.mxu0 0.0
    %370 = vmatmul.mubr.f32.gmra.mrb[0].mxu0 %v301
    %v371 = vpop.f32.mrb[0].mxu0
    %v372 = vadd.f32 0.0, %v371
    %v373 = vpop.f32.mrb[0].mxu0
    %374 = vdwg.mxu0
    %375 = vrot.lane.b32.xlu0 %v133, 104
    %v376 = vpop.permute.xlu0 %375
    %377 = vrot.lane.b32.xlu0 %v133, 72
    %v378 = vpop.permute.xlu0 %377
    %v379 = vsel %vm144, %v376, 0
    %v381 = vsel %vm144, %v378, 0
    %383 = vmatprep.subr.mxu0 0.0
    %384 = vmatpush1.xpose.msra.mxu0 %v381
    %385 = vmatprep.subr.mxu0 0.0
    %386 = vmatpush1.xpose.msra.mxu0 0.0
    %387 = vmatprep.subr.mxu0 0.0
    %388 = vmatpush1.xpose.msra.mxu0 0.0
    %389 = vmatprep.subr.mxu0 0.0
    %390 = vmatpush1.xpose.msra.mxu0 0.0
    %391 = vmatprep.subr.mxu0 0.0
    %392 = vmatpush1.xpose.msra.mxu0 0.0
    %393 = vmatprep.subr.mxu0 0.0
    %394 = vmatpush1.xpose.msra.mxu0 0.0
    %395 = vmatprep.subr.mxu0 0.0
    %396 = vmatpush1.xpose.msra.mxu0 0.0
    %397 = vmatprep.subr.mxu0 0.0
    %398 = vmatpush1.xpose.msra.mxu0 0.0
    %399 = vmatprep.subr.mxu0 0.0
    %400 = vmatpush1.xpose.msra.mxu0 0.0
    %401 = vmatprep.subr.mxu0 0.0
    %402 = vmatpush1.xpose.msra.mxu0 0.0
    %403 = vmatprep.subr.mxu0 0.0
    %404 = vmatpush1.xpose.msra.mxu0 0.0
    %405 = vmatprep.subr.mxu0 0.0
    %406 = vmatpush1.xpose.msra.mxu0 0.0
    %407 = vmatprep.subr.mxu0 0.0
    %408 = vmatpush1.xpose.msra.mxu0 0.0
    %409 = vmatprep.subr.mxu0 0.0
    %410 = vmatpush1.xpose.msra.mxu0 0.0
    %411 = vmatprep.subr.mxu0 0.0
    %412 = vmatpush1.xpose.msra.mxu0 0.0
    %413 = vmatprep.subr.mxu0 0.0
    %414 = vmatpush1.xpose.msra.mxu0 0.0
    %415 = vmatprep.subr.mxu0 0.0
    %416 = vmatpush1.xpose.msra.mxu0 0.0
    %417 = vmatprep.subr.mxu0 0.0
    %418 = vmatpush1.xpose.msra.mxu0 0.0
    %419 = vmatprep.subr.mxu0 0.0
    %420 = vmatpush1.xpose.msra.mxu0 0.0
    %421 = vmatprep.subr.mxu0 0.0
    %422 = vmatpush1.xpose.msra.mxu0 0.0
    %423 = vmatprep.subr.mxu0 0.0
    %424 = vmatpush1.xpose.msra.mxu0 0.0
    %425 = vmatprep.subr.mxu0 0.0
    %426 = vmatpush1.xpose.msra.mxu0 0.0
    %427 = vmatprep.subr.mxu0 0.0
    %428 = vmatpush1.xpose.msra.mxu0 0.0
    %429 = vmatprep.subr.mxu0 0.0
    %430 = vmatpush1.xpose.msra.mxu0 0.0
    %431 = vmatprep.subr.mxu0 0.0
    %432 = vmatpush1.xpose.msra.mxu0 0.0
    %433 = vmatprep.subr.mxu0 0.0
    %434 = vmatpush1.xpose.msra.mxu0 0.0
    %435 = vmatprep.subr.mxu0 0.0
    %436 = vmatpush1.xpose.msra.mxu0 0.0
    %437 = vmatprep.subr.mxu0 0.0
    %438 = vmatpush1.xpose.msra.mxu0 0.0
    %439 = vmatprep.subr.mxu0 0.0
    %440 = vmatpush1.xpose.msra.mxu0 0.0
    %441 = vmatprep.subr.mxu0 0.0
    %442 = vmatpush1.xpose.msra.mxu0 0.0
    %443 = vmatprep.subr.mxu0 0.0
    %444 = vmatpush1.xpose.msra.mxu0 0.0
    %445 = vmatprep.subr.mxu0 0.0
    %446 = vmatpush1.xpose.msra.mxu0 0.0
    %447 = vmatprep.mubr.f32.mxu0 0.0
    %448 = vmatmul.mubr.f32.gmra.mrb[0].mxu0 %v379
    %v449 = vpop.f32.mrb[0].mxu0
    %v450 = vadd.f32 0.0, %v449
    %v451 = vpop.f32.mrb[0].mxu0
    %452 = vdwg.mxu0
    %454 = vrot.lane.b32.xlu0 %v138, 96
    %v455 = vpop.permute.xlu0 %454
    %v456 = vsel %vm144, %v138, 0
    %v458 = vsel %vm144, %v455, 0
    %460 = vmatprep.subr.mxu0 0.0
    %461 = vmatpush1.xpose.msra.mxu0 %v458
    %462 = vmatprep.subr.mxu0 0.0
    %463 = vmatpush1.xpose.msra.mxu0 0.0
    %464 = vmatprep.subr.mxu0 0.0
    %465 = vmatpush1.xpose.msra.mxu0 0.0
    %466 = vmatprep.subr.mxu0 0.0
    %467 = vmatpush1.xpose.msra.mxu0 0.0
    %468 = vmatprep.subr.mxu0 0.0
    %469 = vmatpush1.xpose.msra.mxu0 0.0
    %470 = vmatprep.subr.mxu0 0.0
    %471 = vmatpush1.xpose.msra.mxu0 0.0
    %472 = vmatprep.subr.mxu0 0.0
    %473 = vmatpush1.xpose.msra.mxu0 0.0
    %474 = vmatprep.subr.mxu0 0.0
    %475 = vmatpush1.xpose.msra.mxu0 0.0
    %476 = vmatprep.subr.mxu0 0.0
    %477 = vmatpush1.xpose.msra.mxu0 0.0
    %478 = vmatprep.subr.mxu0 0.0
    %479 = vmatpush1.xpose.msra.mxu0 0.0
    %480 = vmatprep.subr.mxu0 0.0
    %481 = vmatpush1.xpose.msra.mxu0 0.0
    %482 = vmatprep.subr.mxu0 0.0
    %483 = vmatpush1.xpose.msra.mxu0 0.0
    %484 = vmatprep.subr.mxu0 0.0
    %485 = vmatpush1.xpose.msra.mxu0 0.0
    %486 = vmatprep.subr.mxu0 0.0
    %487 = vmatpush1.xpose.msra.mxu0 0.0
    %488 = vmatprep.subr.mxu0 0.0
    %489 = vmatpush1.xpose.msra.mxu0 0.0
    %490 = vmatprep.subr.mxu0 0.0
    %491 = vmatpush1.xpose.msra.mxu0 0.0
    %492 = vmatprep.subr.mxu0 0.0
    %493 = vmatpush1.xpose.msra.mxu0 0.0
    %494 = vmatprep.subr.mxu0 0.0
    %495 = vmatpush1.xpose.msra.mxu0 0.0
    %496 = vmatprep.subr.mxu0 0.0
    %497 = vmatpush1.xpose.msra.mxu0 0.0
    %498 = vmatprep.subr.mxu0 0.0
    %499 = vmatpush1.xpose.msra.mxu0 0.0
    %500 = vmatprep.subr.mxu0 0.0
    %501 = vmatpush1.xpose.msra.mxu0 0.0
    %502 = vmatprep.subr.mxu0 0.0
    %503 = vmatpush1.xpose.msra.mxu0 0.0
    %504 = vmatprep.subr.mxu0 0.0
    %505 = vmatpush1.xpose.msra.mxu0 0.0
    %506 = vmatprep.subr.mxu0 0.0
    %507 = vmatpush1.xpose.msra.mxu0 0.0
    %508 = vmatprep.subr.mxu0 0.0
    %509 = vmatpush1.xpose.msra.mxu0 0.0
    %510 = vmatprep.subr.mxu0 0.0
    %511 = vmatpush1.xpose.msra.mxu0 0.0
    %512 = vmatprep.subr.mxu0 0.0
    %513 = vmatpush1.xpose.msra.mxu0 0.0
    %514 = vmatprep.subr.mxu0 0.0
    %515 = vmatpush1.xpose.msra.mxu0 0.0
    %516 = vmatprep.subr.mxu0 0.0
    %517 = vmatpush1.xpose.msra.mxu0 0.0
    %518 = vmatprep.subr.mxu0 0.0
    %519 = vmatpush1.xpose.msra.mxu0 0.0
    %520 = vmatprep.subr.mxu0 0.0
    %521 = vmatpush1.xpose.msra.mxu0 0.0
    %522 = vmatprep.subr.mxu0 0.0
    %523 = vmatpush1.xpose.msra.mxu0 0.0
    %524 = vmatprep.mubr.f32.mxu0 0.0
    %525 = vmatmul.mubr.f32.gmra.mrb[0].mxu0 %v456
    %v526 = vpop.f32.mrb[0].mxu0
    %v527 = vadd.f32 0.0, %v526
    %v528 = vpop.f32.mrb[0].mxu0
    %529 = vdwg.mxu0
    %530 = vrot.lane.b32.xlu0 %v138, 120
    %v531 = vpop.permute.xlu0 %530
    %532 = vrot.lane.b32.xlu0 %v138, 88
    %v533 = vpop.permute.xlu0 %532
    %v534 = vsel %vm144, %v531, 0
    %v536 = vsel %vm144, %v533, 0
    %538 = vmatprep.subr.mxu0 0.0
    %539 = vmatpush1.xpose.msra.mxu0 %v536
    %540 = vmatprep.subr.mxu0 0.0
    %541 = vmatpush1.xpose.msra.mxu0 0.0
    %542 = vmatprep.subr.mxu0 0.0
    %543 = vmatpush1.xpose.msra.mxu0 0.0
    %544 = vmatprep.subr.mxu0 0.0
    %545 = vmatpush1.xpose.msra.mxu0 0.0
    %546 = vmatprep.subr.mxu0 0.0
    %547 = vmatpush1.xpose.msra.mxu0 0.0
    %548 = vmatprep.subr.mxu0 0.0
    %549 = vmatpush1.xpose.msra.mxu0 0.0
    %550 = vmatprep.subr.mxu0 0.0
    %551 = vmatpush1.xpose.msra.mxu0 0.0
    %552 = vmatprep.subr.mxu0 0.0
    %553 = vmatpush1.xpose.msra.mxu0 0.0
    %554 = vmatprep.subr.mxu0 0.0
    %555 = vmatpush1.xpose.msra.mxu0 0.0
    %556 = vmatprep.subr.mxu0 0.0
    %557 = vmatpush1.xpose.msra.mxu0 0.0
    %558 = vmatprep.subr.mxu0 0.0
    %559 = vmatpush1.xpose.msra.mxu0 0.0
    %560 = vmatprep.subr.mxu0 0.0
    %561 = vmatpush1.xpose.msra.mxu0 0.0
    %562 = vmatprep.subr.mxu0 0.0
    %563 = vmatpush1.xpose.msra.mxu0 0.0
    %564 = vmatprep.subr.mxu0 0.0
    %565 = vmatpush1.xpose.msra.mxu0 0.0
    %566 = vmatprep.subr.mxu0 0.0
    %567 = vmatpush1.xpose.msra.mxu0 0.0
    %568 = vmatprep.subr.mxu0 0.0
    %569 = vmatpush1.xpose.msra.mxu0 0.0
    %570 = vmatprep.subr.mxu0 0.0
    %571 = vmatpush1.xpose.msra.mxu0 0.0
    %572 = vmatprep.subr.mxu0 0.0
    %573 = vmatpush1.xpose.msra.mxu0 0.0
    %574 = vmatprep.subr.mxu0 0.0
    %575 = vmatpush1.xpose.msra.mxu0 0.0
    %576 = vmatprep.subr.mxu0 0.0
    %577 = vmatpush1.xpose.msra.mxu0 0.0
    %578 = vmatprep.subr.mxu0 0.0
    %579 = vmatpush1.xpose.msra.mxu0 0.0
    %580 = vmatprep.subr.mxu0 0.0
    %581 = vmatpush1.xpose.msra.mxu0 0.0
    %582 = vmatprep.subr.mxu0 0.0
    %583 = vmatpush1.xpose.msra.mxu0 0.0
    %584 = vmatprep.subr.mxu0 0.0
    %585 = vmatpush1.xpose.msra.mxu0 0.0
    %586 = vmatprep.subr.mxu0 0.0
    %587 = vmatpush1.xpose.msra.mxu0 0.0
    %588 = vmatprep.subr.mxu0 0.0
    %589 = vmatpush1.xpose.msra.mxu0 0.0
    %590 = vmatprep.subr.mxu0 0.0
    %591 = vmatpush1.xpose.msra.mxu0 0.0
    %592 = vmatprep.subr.mxu0 0.0
    %593 = vmatpush1.xpose.msra.mxu0 0.0
    %594 = vmatprep.subr.mxu0 0.0
    %595 = vmatpush1.xpose.msra.mxu0 0.0
    %596 = vmatprep.subr.mxu0 0.0
    %597 = vmatpush1.xpose.msra.mxu0 0.0
    %598 = vmatprep.subr.mxu0 0.0
    %599 = vmatpush1.xpose.msra.mxu0 0.0
    %600 = vmatprep.subr.mxu0 0.0
    %601 = vmatpush1.xpose.msra.mxu0 0.0
    %602 = vmatprep.mubr.f32.mxu0 0.0
    %603 = vmatmul.mubr.f32.gmra.mrb[0].mxu0 %v534
    %v604 = vpop.f32.mrb[0].mxu0
    %v605 = vadd.f32 0.0, %v604
    %v606 = vpop.f32.mrb[0].mxu0
    %607 = vdwg.mxu0
    %608 = vrot.lane.b32.xlu0 %v138, 112
    %v609 = vpop.permute.xlu0 %608
    %610 = vrot.lane.b32.xlu0 %v138, 80
    %v611 = vpop.permute.xlu0 %610
    %v612 = vsel %vm144, %v609, 0
    %v614 = vsel %vm144, %v611, 0
    %616 = vmatprep.subr.mxu0 0.0
    %617 = vmatpush1.xpose.msra.mxu0 %v614
    %618 = vmatprep.subr.mxu0 0.0
    %619 = vmatpush1.xpose.msra.mxu0 0.0
    %620 = vmatprep.subr.mxu0 0.0
    %621 = vmatpush1.xpose.msra.mxu0 0.0
    %622 = vmatprep.subr.mxu0 0.0
    %623 = vmatpush1.xpose.msra.mxu0 0.0
    %624 = vmatprep.subr.mxu0 0.0
    %625 = vmatpush1.xpose.msra.mxu0 0.0
    %626 = vmatprep.subr.mxu0 0.0
    %627 = vmatpush1.xpose.msra.mxu0 0.0
    %628 = vmatprep.subr.mxu0 0.0
    %629 = vmatpush1.xpose.msra.mxu0 0.0
    %630 = vmatprep.subr.mxu0 0.0
    %631 = vmatpush1.xpose.msra.mxu0 0.0
    %632 = vmatprep.subr.mxu0 0.0
    %633 = vmatpush1.xpose.msra.mxu0 0.0
    %634 = vmatprep.subr.mxu0 0.0
    %635 = vmatpush1.xpose.msra.mxu0 0.0
    %636 = vmatprep.subr.mxu0 0.0
    %637 = vmatpush1.xpose.msra.mxu0 0.0
    %638 = vmatprep.subr.mxu0 0.0
    %639 = vmatpush1.xpose.msra.mxu0 0.0
    %640 = vmatprep.subr.mxu0 0.0
    %641 = vmatpush1.xpose.msra.mxu0 0.0
    %642 = vmatprep.subr.mxu0 0.0
    %643 = vmatpush1.xpose.msra.mxu0 0.0
    %644 = vmatprep.subr.mxu0 0.0
    %645 = vmatpush1.xpose.msra.mxu0 0.0
    %646 = vmatprep.subr.mxu0 0.0
    %647 = vmatpush1.xpose.msra.mxu0 0.0
    %648 = vmatprep.subr.mxu0 0.0
    %649 = vmatpush1.xpose.msra.mxu0 0.0
    %650 = vmatprep.subr.mxu0 0.0
    %651 = vmatpush1.xpose.msra.mxu0 0.0
    %652 = vmatprep.subr.mxu0 0.0
    %653 = vmatpush1.xpose.msra.mxu0 0.0
    %654 = vmatprep.subr.mxu0 0.0
    %655 = vmatpush1.xpose.msra.mxu0 0.0
    %656 = vmatprep.subr.mxu0 0.0
    %657 = vmatpush1.xpose.msra.mxu0 0.0
    %658 = vmatprep.subr.mxu0 0.0
    %659 = vmatpush1.xpose.msra.mxu0 0.0
    %660 = vmatprep.subr.mxu0 0.0
    %661 = vmatpush1.xpose.msra.mxu0 0.0
    %662 = vmatprep.subr.mxu0 0.0
    %663 = vmatpush1.xpose.msra.mxu0 0.0
    %664 = vmatprep.subr.mxu0 0.0
    %665 = vmatpush1.xpose.msra.mxu0 0.0
    %666 = vmatprep.subr.mxu0 0.0
    %667 = vmatpush1.xpose.msra.mxu0 0.0
    %668 = vmatprep.subr.mxu0 0.0
    %669 = vmatpush1.xpose.msra.mxu0 0.0
    %670 = vmatprep.subr.mxu0 0.0
    %671 = vmatpush1.xpose.msra.mxu0 0.0
    %672 = vmatprep.subr.mxu0 0.0
    %673 = vmatpush1.xpose.msra.mxu0 0.0
    %674 = vmatprep.subr.mxu0 0.0
    %675 = vmatpush1.xpose.msra.mxu0 0.0
    %676 = vmatprep.subr.mxu0 0.0
    %677 = vmatpush1.xpose.msra.mxu0 0.0
    %678 = vmatprep.subr.mxu0 0.0
    %679 = vmatpush1.xpose.msra.mxu0 0.0
    %680 = vmatprep.mubr.f32.mxu0 0.0
    %681 = vmatmul.mubr.f32.gmra.mrb[0].mxu0 %v612
    %v682 = vpop.f32.mrb[0].mxu0
    %v683 = vadd.f32 0.0, %v682
    %v684 = vpop.f32.mrb[0].mxu0
    %685 = vdwg.mxu0
    %686 = vrot.lane.b32.xlu0 %v138, 104
    %v687 = vpop.permute.xlu0 %686
    %688 = vrot.lane.b32.xlu0 %v138, 72
    %v689 = vpop.permute.xlu0 %688
    %v690 = vsel %vm144, %v687, 0
    %v692 = vsel %vm144, %v689, 0
    %694 = vmatprep.subr.mxu0 0.0
    %695 = vmatpush1.xpose.msra.mxu0 %v692
    %696 = vmatprep.subr.mxu0 0.0
    %697 = vmatpush1.xpose.msra.mxu0 0.0
    %698 = vmatprep.subr.mxu0 0.0
    %699 = vmatpush1.xpose.msra.mxu0 0.0
    %700 = vmatprep.subr.mxu0 0.0
    %701 = vmatpush1.xpose.msra.mxu0 0.0
    %702 = vmatprep.subr.mxu0 0.0
    %703 = vmatpush1.xpose.msra.mxu0 0.0
    %704 = vmatprep.subr.mxu0 0.0
    %705 = vmatpush1.xpose.msra.mxu0 0.0
    %706 = vmatprep.subr.mxu0 0.0
    %707 = vmatpush1.xpose.msra.mxu0 0.0
    %708 = vmatprep.subr.mxu0 0.0
    %709 = vmatpush1.xpose.msra.mxu0 0.0
    %710 = vmatprep.subr.mxu0 0.0
    %711 = vmatpush1.xpose.msra.mxu0 0.0
    %712 = vmatprep.subr.mxu0 0.0
    %713 = vmatpush1.xpose.msra.mxu0 0.0
    %714 = vmatprep.subr.mxu0 0.0
    %715 = vmatpush1.xpose.msra.mxu0 0.0
    %716 = vmatprep.subr.mxu0 0.0
    %717 = vmatpush1.xpose.msra.mxu0 0.0
    %718 = vmatprep.subr.mxu0 0.0
    %719 = vmatpush1.xpose.msra.mxu0 0.0
    %720 = vmatprep.subr.mxu0 0.0
    %721 = vmatpush1.xpose.msra.mxu0 0.0
    %722 = vmatprep.subr.mxu0 0.0
    %723 = vmatpush1.xpose.msra.mxu0 0.0
    %724 = vmatprep.subr.mxu0 0.0
    %725 = vmatpush1.xpose.msra.mxu0 0.0
    %726 = vmatprep.subr.mxu0 0.0
    %727 = vmatpush1.xpose.msra.mxu0 0.0
    %728 = vmatprep.subr.mxu0 0.0
    %729 = vmatpush1.xpose.msra.mxu0 0.0
    %730 = vmatprep.subr.mxu0 0.0
    %731 = vmatpush1.xpose.msra.mxu0 0.0
    %732 = vmatprep.subr.mxu0 0.0
    %733 = vmatpush1.xpose.msra.mxu0 0.0
    %734 = vmatprep.subr.mxu0 0.0
    %735 = vmatpush1.xpose.msra.mxu0 0.0
    %736 = vmatprep.subr.mxu0 0.0
    %737 = vmatpush1.xpose.msra.mxu0 0.0
    %738 = vmatprep.subr.mxu0 0.0
    %739 = vmatpush1.xpose.msra.mxu0 0.0
    %740 = vmatprep.subr.mxu0 0.0
    %741 = vmatpush1.xpose.msra.mxu0 0.0
    %742 = vmatprep.subr.mxu0 0.0
    %743 = vmatpush1.xpose.msra.mxu0 0.0
    %744 = vmatprep.subr.mxu0 0.0
    %745 = vmatpush1.xpose.msra.mxu0 0.0
    %746 = vmatprep.subr.mxu0 0.0
    %747 = vmatpush1.xpose.msra.mxu0 0.0
    %748 = vmatprep.subr.mxu0 0.0
    %749 = vmatpush1.xpose.msra.mxu0 0.0
    %750 = vmatprep.subr.mxu0 0.0
    %751 = vmatpush1.xpose.msra.mxu0 0.0
    %752 = vmatprep.subr.mxu0 0.0
    %753 = vmatpush1.xpose.msra.mxu0 0.0
    %754 = vmatprep.subr.mxu0 0.0
    %755 = vmatpush1.xpose.msra.mxu0 0.0
    %756 = vmatprep.subr.mxu0 0.0
    %757 = vmatpush1.xpose.msra.mxu0 0.0
    %758 = vmatprep.mubr.f32.mxu0 0.0
    %759 = vmatmul.mubr.f32.gmra.mrb[0].mxu0 %v690
    %v760 = vpop.f32.mrb[0].mxu0
    %v761 = vadd.f32 0.0, %v760
    %v762 = vpop.f32.mrb[0].mxu0
    %763 = vdwg.mxu0
    %v764 = vsel %vm144, %v216, -inf
    %765 = vmax.xlane.f32.xlu0 %v764
    %v766 = vpop.xlane.xlu0 %765
    %v767 = vsel %vm144, %v294, -inf
    %768 = vmax.xlane.f32.xlu0 %v767
    %v769 = vpop.xlane.xlu0 %768
    %v770 = vsel %vm144, %v372, -inf
    %771 = vmax.xlane.f32.xlu0 %v770
    %v772 = vpop.xlane.xlu0 %771
    %v773 = vsel %vm144, %v450, -inf
    %774 = vmax.xlane.f32.xlu0 %v773
    %v775 = vpop.xlane.xlu0 %774
    %v776 = vsel %vm144, %v527, -inf
    %777 = vmax.xlane.f32.xlu0 %v776
    %v778 = vpop.xlane.xlu0 %777
    %v779 = vsel %vm144, %v605, -inf
    %780 = vmax.xlane.f32.xlu0 %v779
    %v781 = vpop.xlane.xlu0 %780
    %v782 = vsel %vm144, %v683, -inf
    %783 = vmax.xlane.f32.xlu0 %v782
    %v784 = vpop.xlane.xlu0 %783
    %v785 = vsel %vm144, %v761, -inf
    %786 = vmax.xlane.f32.xlu0 %v785
    %v787 = vpop.xlane.xlu0 %786
    %v788 = vsub.f32 %v216, %v766
    %v789 = vsub.f32 %v294, %v769
    %v790 = vsub.f32 %v372, %v772
    %v791 = vsub.f32 %v450, %v775
    %v792 = vsub.f32 %v527, %v778
    %v793 = vsub.f32 %v605, %v781
    %v794 = vsub.f32 %v683, %v784
    %v795 = vsub.f32 %v761, %v787
    %v796 = vmul.f32 %v788, 1.442695
    %v797 = vpow.pop %v796
    %v798 = vmul.f32 %v789, 1.442695
    %v799 = vpow.pop %v798
    %v800 = vmul.f32 %v790, 1.442695
    %v801 = vpow.pop %v800
    %v802 = vmul.f32 %v791, 1.442695
    %v803 = vpow.pop %v802
    %v804 = vmul.f32 %v792, 1.442695
    %v805 = vpow.pop %v804
    %v806 = vmul.f32 %v793, 1.442695
    %v807 = vpow.pop %v806
    %v808 = vmul.f32 %v794, 1.442695
    %v809 = vpow.pop %v808
    %v810 = vmul.f32 %v795, 1.442695
    %v811 = vpow.pop %v810
    %v812 = vsel %vm144, %v797, 0.0
    %813 = vadd.xlane.f32.xlu0 %v812
    %v814 = vpop.xlane.xlu0 %813
    %v815 = vsel %vm144, %v799, 0.0
    %816 = vadd.xlane.f32.xlu0 %v815
    %v817 = vpop.xlane.xlu0 %816
    %v818 = vsel %vm144, %v801, 0.0
    %819 = vadd.xlane.f32.xlu0 %v818
    %v820 = vpop.xlane.xlu0 %819
    %v821 = vsel %vm144, %v803, 0.0
    %822 = vadd.xlane.f32.xlu0 %v821
    %v823 = vpop.xlane.xlu0 %822
    %v824 = vsel %vm144, %v805, 0.0
    %825 = vadd.xlane.f32.xlu0 %v824
    %v826 = vpop.xlane.xlu0 %825
    %v827 = vsel %vm144, %v807, 0.0
    %828 = vadd.xlane.f32.xlu0 %v827
    %v829 = vpop.xlane.xlu0 %828
    %v830 = vsel %vm144, %v809, 0.0
    %831 = vadd.xlane.f32.xlu0 %v830
    %v832 = vpop.xlane.xlu0 %831
    %v833 = vsel %vm144, %v811, 0.0
    %834 = vadd.xlane.f32.xlu0 %v833
    %v835 = vpop.xlane.xlu0 %834
    %v836 = vrcp.pop %v814
    %v837 = vrcp.pop %v817
    %v838 = vrcp.pop %v820
    %v839 = vrcp.pop %v823
    %v840 = vrcp.pop %v826
    %v841 = vrcp.pop %v829
    %v842 = vrcp.pop %v832
    %v843 = vrcp.pop %v835
    %v844 = vmul.f32 %v797, %v836
    %v845 = vmul.f32 %v799, %v837
    %v846 = vmul.f32 %v801, %v838
    %v847 = vmul.f32 %v803, %v839
    %v848 = vmul.f32 %v805, %v840
    %v849 = vmul.f32 %v807, %v841
    %v850 = vmul.f32 %v809, %v842
    %v851 = vmul.f32 %v811, %v843
    %852 = vst.msk [vmem:[#allocation8] sm:$0xff] %vm144, %v844
    %853 = vst.msk [vmem:[#allocation8 + $0x8] sm:$0xff] %vm144, %v845
    %854 = vst.msk [vmem:[#allocation8 + $0x10] sm:$0xff] %vm144, %v846
    %855 = vst.msk [vmem:[#allocation8 + $0x18] sm:$0xff] %vm144, %v847
    %856 = vst.msk [vmem:[#allocation8 + $0x20] sm:$0xff] %vm144, %v848
    %857 = vst.msk [vmem:[#allocation8 + $0x28] sm:$0xff] %vm144, %v849
    %858 = vst.msk [vmem:[#allocation8 + $0x30] sm:$0xff] %vm144, %v850
    %859 = vst.msk [vmem:[#allocation8 + $0x38] sm:$0xff] %vm144, %v851
    %860 = vrot.lane.b32.xlu0 %v133, 64
    %v861 = vpop.permute.xlu0 %860
    %v864 = vsel %vm144, %v844, 0
    %866 = vmatprep.subr.mxu0 0.0
    %867 = vmatpush1.msra.mxu0 %v861
    %868 = vmatprep.subr.mxu0 0.0
    %869 = vmatpush1.msra.mxu0 0.0
    %870 = vmatprep.subr.mxu0 0.0
    %871 = vmatpush1.msra.mxu0 0.0
    %872 = vmatprep.subr.mxu0 0.0
    %873 = vmatpush1.msra.mxu0 0.0
    %874 = vmatprep.subr.mxu0 0.0
    %875 = vmatpush1.msra.mxu0 0.0
    %876 = vmatprep.subr.mxu0 0.0
    %877 = vmatpush1.msra.mxu0 0.0
    %878 = vmatprep.subr.mxu0 0.0
    %879 = vmatpush1.msra.mxu0 0.0
    %880 = vmatprep.subr.mxu0 0.0
    %881 = vmatpush1.msra.mxu0 0.0
    %882 = vmatprep.subr.mxu0 0.0
    %883 = vmatpush1.msra.mxu0 0.0
    %884 = vmatprep.subr.mxu0 0.0
    %885 = vmatpush1.msra.mxu0 0.0
    %886 = vmatprep.subr.mxu0 0.0
    %887 = vmatpush1.msra.mxu0 0.0
    %888 = vmatprep.subr.mxu0 0.0
    %889 = vmatpush1.msra.mxu0 0.0
    %890 = vmatprep.subr.mxu0 0.0
    %891 = vmatpush1.msra.mxu0 0.0
    %892 = vmatprep.subr.mxu0 0.0
    %893 = vmatpush1.msra.mxu0 0.0
    %894 = vmatprep.subr.mxu0 0.0
    %895 = vmatpush1.msra.mxu0 0.0
    %896 = vmatprep.subr.mxu0 0.0
    %897 = vmatpush1.msra.mxu0 0.0
    %898 = vmatprep.subr.mxu0 0.0
    %899 = vmatpush1.msra.mxu0 0.0
    %900 = vmatprep.subr.mxu0 0.0
    %901 = vmatpush1.msra.mxu0 0.0
    %902 = vmatprep.subr.mxu0 0.0
    %903 = vmatpush1.msra.mxu0 0.0
    %904 = vmatprep.subr.mxu0 0.0
    %905 = vmatpush1.msra.mxu0 0.0
    %906 = vmatprep.subr.mxu0 0.0
    %907 = vmatpush1.msra.mxu0 0.0
    %908 = vmatprep.subr.mxu0 0.0
    %909 = vmatpush1.msra.mxu0 0.0
    %910 = vmatprep.subr.mxu0 0.0
    %911 = vmatpush1.msra.mxu0 0.0
    %912 = vmatprep.subr.mxu0 0.0
    %913 = vmatpush1.msra.mxu0 0.0
    %914 = vmatprep.subr.mxu0 0.0
    %915 = vmatpush1.msra.mxu0 0.0
    %916 = vmatprep.subr.mxu0 0.0
    %917 = vmatpush1.msra.mxu0 0.0
    %918 = vmatprep.subr.mxu0 0.0
    %919 = vmatpush1.msra.mxu0 0.0
    %920 = vmatprep.subr.mxu0 0.0
    %921 = vmatpush1.msra.mxu0 0.0
    %922 = vmatprep.subr.mxu0 0.0
    %923 = vmatpush1.msra.mxu0 0.0
    %924 = vmatprep.subr.mxu0 0.0
    %925 = vmatpush1.msra.mxu0 0.0
    %926 = vmatprep.subr.mxu0 0.0
    %927 = vmatpush1.msra.mxu0 0.0
    %928 = vmatprep.subr.mxu0 0.0
    %929 = vmatpush1.msra.mxu0 0.0
    %930 = vmatprep.mubr.f32.mxu0 0.0
    %931 = vmatmul.mubr.f32.gmra.mrb[0].mxu0 %v864
    %v932 = vpop.f32.mrb[0].mxu0
    %v933 = vadd.f32 0.0, %v932
    %v934 = vpop.f32.mrb[0].mxu0
    %935 = vdwg.mxu0
    %936 = vrot.lane.b32.xlu0 %v133, 56
    %v937 = vpop.permute.xlu0 %936
    %v940 = vsel %vm144, %v845, 0
    %942 = vmatprep.subr.mxu0 0.0
    %943 = vmatpush1.msra.mxu0 %v937
    %944 = vmatprep.subr.mxu0 0.0
    %945 = vmatpush1.msra.mxu0 0.0
    %946 = vmatprep.subr.mxu0 0.0
    %947 = vmatpush1.msra.mxu0 0.0
    %948 = vmatprep.subr.mxu0 0.0
    %949 = vmatpush1.msra.mxu0 0.0
    %950 = vmatprep.subr.mxu0 0.0
    %951 = vmatpush1.msra.mxu0 0.0
    %952 = vmatprep.subr.mxu0 0.0
    %953 = vmatpush1.msra.mxu0 0.0
    %954 = vmatprep.subr.mxu0 0.0
    %955 = vmatpush1.msra.mxu0 0.0
    %956 = vmatprep.subr.mxu0 0.0
    %957 = vmatpush1.msra.mxu0 0.0
    %958 = vmatprep.subr.mxu0 0.0
    %959 = vmatpush1.msra.mxu0 0.0
    %960 = vmatprep.subr.mxu0 0.0
    %961 = vmatpush1.msra.mxu0 0.0
    %962 = vmatprep.subr.mxu0 0.0
    %963 = vmatpush1.msra.mxu0 0.0
    %964 = vmatprep.subr.mxu0 0.0
    %965 = vmatpush1.msra.mxu0 0.0
    %966 = vmatprep.subr.mxu0 0.0
    %967 = vmatpush1.msra.mxu0 0.0
    %968 = vmatprep.subr.mxu0 0.0
    %969 = vmatpush1.msra.mxu0 0.0
    %970 = vmatprep.subr.mxu0 0.0
    %971 = vmatpush1.msra.mxu0 0.0
    %972 = vmatprep.subr.mxu0 0.0
    %973 = vmatpush1.msra.mxu0 0.0
    %974 = vmatprep.subr.mxu0 0.0
    %975 = vmatpush1.msra.mxu0 0.0
    %976 = vmatprep.subr.mxu0 0.0
    %977 = vmatpush1.msra.mxu0 0.0
    %978 = vmatprep.subr.mxu0 0.0
    %979 = vmatpush1.msra.mxu0 0.0
    %980 = vmatprep.subr.mxu0 0.0
    %981 = vmatpush1.msra.mxu0 0.0
    %982 = vmatprep.subr.mxu0 0.0
    %983 = vmatpush1.msra.mxu0 0.0
    %984 = vmatprep.subr.mxu0 0.0
    %985 = vmatpush1.msra.mxu0 0.0
    %986 = vmatprep.subr.mxu0 0.0
    %987 = vmatpush1.msra.mxu0 0.0
    %988 = vmatprep.subr.mxu0 0.0
    %989 = vmatpush1.msra.mxu0 0.0
    %990 = vmatprep.subr.mxu0 0.0
    %991 = vmatpush1.msra.mxu0 0.0
    %992 = vmatprep.subr.mxu0 0.0
    %993 = vmatpush1.msra.mxu0 0.0
    %994 = vmatprep.subr.mxu0 0.0
    %995 = vmatpush1.msra.mxu0 0.0
    %996 = vmatprep.subr.mxu0 0.0
    %997 = vmatpush1.msra.mxu0 0.0
    %998 = vmatprep.subr.mxu0 0.0
    %999 = vmatpush1.msra.mxu0 0.0
    %1000 = vmatprep.subr.mxu0 0.0
    %1001 = vmatpush1.msra.mxu0 0.0
    %1002 = vmatprep.subr.mxu0 0.0
    %1003 = vmatpush1.msra.mxu0 0.0
    %1004 = vmatprep.subr.mxu0 0.0
    %1005 = vmatpush1.msra.mxu0 0.0
    %1006 = vmatprep.mubr.f32.mxu0 0.0
    %1007 = vmatmul.mubr.f32.gmra.mrb[0].mxu0 %v940
    %v1008 = vpop.f32.mrb[0].mxu0
    %v1009 = vadd.f32 0.0, %v1008
    %v1010 = vpop.f32.mrb[0].mxu0
    %1011 = vdwg.mxu0
    %1012 = vrot.lane.b32.xlu0 %v133, 48
    %v1013 = vpop.permute.xlu0 %1012
    %v1016 = vsel %vm144, %v846, 0
    %1018 = vmatprep.subr.mxu0 0.0
    %1019 = vmatpush1.msra.mxu0 %v1013
    %1020 = vmatprep.subr.mxu0 0.0
    %1021 = vmatpush1.msra.mxu0 0.0
    %1022 = vmatprep.subr.mxu0 0.0
    %1023 = vmatpush1.msra.mxu0 0.0
    %1024 = vmatprep.subr.mxu0 0.0
    %1025 = vmatpush1.msra.mxu0 0.0
    %1026 = vmatprep.subr.mxu0 0.0
    %1027 = vmatpush1.msra.mxu0 0.0
    %1028 = vmatprep.subr.mxu0 0.0
    %1029 = vmatpush1.msra.mxu0 0.0
    %1030 = vmatprep.subr.mxu0 0.0
    %1031 = vmatpush1.msra.mxu0 0.0
    %1032 = vmatprep.subr.mxu0 0.0
    %1033 = vmatpush1.msra.mxu0 0.0
    %1034 = vmatprep.subr.mxu0 0.0
    %1035 = vmatpush1.msra.mxu0 0.0
    %1036 = vmatprep.subr.mxu0 0.0
    %1037 = vmatpush1.msra.mxu0 0.0
    %1038 = vmatprep.subr.mxu0 0.0
    %1039 = vmatpush1.msra.mxu0 0.0
    %1040 = vmatprep.subr.mxu0 0.0
    %1041 = vmatpush1.msra.mxu0 0.0
    %1042 = vmatprep.subr.mxu0 0.0
    %1043 = vmatpush1.msra.mxu0 0.0
    %1044 = vmatprep.subr.mxu0 0.0
    %1045 = vmatpush1.msra.mxu0 0.0
    %1046 = vmatprep.subr.mxu0 0.0
    %1047 = vmatpush1.msra.mxu0 0.0
    %1048 = vmatprep.subr.mxu0 0.0
    %1049 = vmatpush1.msra.mxu0 0.0
    %1050 = vmatprep.subr.mxu0 0.0
    %1051 = vmatpush1.msra.mxu0 0.0
    %1052 = vmatprep.subr.mxu0 0.0
    %1053 = vmatpush1.msra.mxu0 0.0
    %1054 = vmatprep.subr.mxu0 0.0
    %1055 = vmatpush1.msra.mxu0 0.0
    %1056 = vmatprep.subr.mxu0 0.0
    %1057 = vmatpush1.msra.mxu0 0.0
    %1058 = vmatprep.subr.mxu0 0.0
    %1059 = vmatpush1.msra.mxu0 0.0
    %1060 = vmatprep.subr.mxu0 0.0
    %1061 = vmatpush1.msra.mxu0 0.0
    %1062 = vmatprep.subr.mxu0 0.0
    %1063 = vmatpush1.msra.mxu0 0.0
    %1064 = vmatprep.subr.mxu0 0.0
    %1065 = vmatpush1.msra.mxu0 0.0
    %1066 = vmatprep.subr.mxu0 0.0
    %1067 = vmatpush1.msra.mxu0 0.0
    %1068 = vmatprep.subr.mxu0 0.0
    %1069 = vmatpush1.msra.mxu0 0.0
    %1070 = vmatprep.subr.mxu0 0.0
    %1071 = vmatpush1.msra.mxu0 0.0
    %1072 = vmatprep.subr.mxu0 0.0
    %1073 = vmatpush1.msra.mxu0 0.0
    %1074 = vmatprep.subr.mxu0 0.0
    %1075 = vmatpush1.msra.mxu0 0.0
    %1076 = vmatprep.subr.mxu0 0.0
    %1077 = vmatpush1.msra.mxu0 0.0
    %1078 = vmatprep.subr.mxu0 0.0
    %1079 = vmatpush1.msra.mxu0 0.0
    %1080 = vmatprep.subr.mxu0 0.0
    %1081 = vmatpush1.msra.mxu0 0.0
    %1082 = vmatprep.mubr.f32.mxu0 0.0
    %1083 = vmatmul.mubr.f32.gmra.mrb[0].mxu0 %v1016
    %v1084 = vpop.f32.mrb[0].mxu0
    %v1085 = vadd.f32 0.0, %v1084
    %v1086 = vpop.f32.mrb[0].mxu0
    %1087 = vdwg.mxu0
    %1088 = vrot.lane.b32.xlu0 %v133, 40
    %v1089 = vpop.permute.xlu0 %1088
    %v1092 = vsel %vm144, %v847, 0
    %1094 = vmatprep.subr.mxu0 0.0
    %1095 = vmatpush1.msra.mxu0 %v1089
    %1096 = vmatprep.subr.mxu0 0.0
    %1097 = vmatpush1.msra.mxu0 0.0
    %1098 = vmatprep.subr.mxu0 0.0
    %1099 = vmatpush1.msra.mxu0 0.0
    %1100 = vmatprep.subr.mxu0 0.0
    %1101 = vmatpush1.msra.mxu0 0.0
    %1102 = vmatprep.subr.mxu0 0.0
    %1103 = vmatpush1.msra.mxu0 0.0
    %1104 = vmatprep.subr.mxu0 0.0
    %1105 = vmatpush1.msra.mxu0 0.0
    %1106 = vmatprep.subr.mxu0 0.0
    %1107 = vmatpush1.msra.mxu0 0.0
    %1108 = vmatprep.subr.mxu0 0.0
    %1109 = vmatpush1.msra.mxu0 0.0
    %1110 = vmatprep.subr.mxu0 0.0
    %1111 = vmatpush1.msra.mxu0 0.0
    %1112 = vmatprep.subr.mxu0 0.0
    %1113 = vmatpush1.msra.mxu0 0.0
    %1114 = vmatprep.subr.mxu0 0.0
    %1115 = vmatpush1.msra.mxu0 0.0
    %1116 = vmatprep.subr.mxu0 0.0
    %1117 = vmatpush1.msra.mxu0 0.0
    %1118 = vmatprep.subr.mxu0 0.0
    %1119 = vmatpush1.msra.mxu0 0.0
    %1120 = vmatprep.subr.mxu0 0.0
    %1121 = vmatpush1.msra.mxu0 0.0
    %1122 = vmatprep.subr.mxu0 0.0
    %1123 = vmatpush1.msra.mxu0 0.0
    %1124 = vmatprep.subr.mxu0 0.0
    %1125 = vmatpush1.msra.mxu0 0.0
    %1126 = vmatprep.subr.mxu0 0.0
    %1127 = vmatpush1.msra.mxu0 0.0
    %1128 = vmatprep.subr.mxu0 0.0
    %1129 = vmatpush1.msra.mxu0 0.0
    %1130 = vmatprep.subr.mxu0 0.0
    %1131 = vmatpush1.msra.mxu0 0.0
    %1132 = vmatprep.subr.mxu0 0.0
    %1133 = vmatpush1.msra.mxu0 0.0
    %1134 = vmatprep.subr.mxu0 0.0
    %1135 = vmatpush1.msra.mxu0 0.0
    %1136 = vmatprep.subr.mxu0 0.0
    %1137 = vmatpush1.msra.mxu0 0.0
    %1138 = vmatprep.subr.mxu0 0.0
    %1139 = vmatpush1.msra.mxu0 0.0
    %1140 = vmatprep.subr.mxu0 0.0
    %1141 = vmatpush1.msra.mxu0 0.0
    %1142 = vmatprep.subr.mxu0 0.0
    %1143 = vmatpush1.msra.mxu0 0.0
    %1144 = vmatprep.subr.mxu0 0.0
    %1145 = vmatpush1.msra.mxu0 0.0
    %1146 = vmatprep.subr.mxu0 0.0
    %1147 = vmatpush1.msra.mxu0 0.0
    %1148 = vmatprep.subr.mxu0 0.0
    %1149 = vmatpush1.msra.mxu0 0.0
    %1150 = vmatprep.subr.mxu0 0.0
    %1151 = vmatpush1.msra.mxu0 0.0
    %1152 = vmatprep.subr.mxu0 0.0
    %1153 = vmatpush1.msra.mxu0 0.0
    %1154 = vmatprep.subr.mxu0 0.0
    %1155 = vmatpush1.msra.mxu0 0.0
    %1156 = vmatprep.subr.mxu0 0.0
    %1157 = vmatpush1.msra.mxu0 0.0
    %1158 = vmatprep.mubr.f32.mxu0 0.0
    %1159 = vmatmul.mubr.f32.gmra.mrb[0].mxu0 %v1092
    %v1160 = vpop.f32.mrb[0].mxu0
    %v1161 = vadd.f32 0.0, %v1160
    %v1162 = vpop.f32.mrb[0].mxu0
    %1163 = vdwg.mxu0
    %1165 = vrot.lane.b32.xlu0 %v1009, 8
    %v1166 = vpop.permute.xlu0 %1165
    %1169 = vrot.lane.b32.xlu0 %v1085, 16
    %v1170 = vpop.permute.xlu0 %1169
    %1173 = vrot.lane.b32.xlu0 %v1161, 24
    %v1174 = vpop.permute.xlu0 %1173
    %v1176 = vsel %vm144, %v933, %v1166
    %vm1177 = vcmask 130048
    %v1178 = vsel %vm1177, %v1176, %v1170
    %vm1179 = vcmask 195584
    %v1180 = vsel %vm1179, %v1178, %v1174
    %1181 = vrot.lane.b32.xlu0 %v138, 64
    %v1182 = vpop.permute.xlu0 %1181
    %v1185 = vsel %vm144, %v848, 0
    %1187 = vmatprep.subr.mxu0 0.0
    %1188 = vmatpush1.msra.mxu0 %v1182
    %1189 = vmatprep.subr.mxu0 0.0
    %1190 = vmatpush1.msra.mxu0 0.0
    %1191 = vmatprep.subr.mxu0 0.0
    %1192 = vmatpush1.msra.mxu0 0.0
    %1193 = vmatprep.subr.mxu0 0.0
    %1194 = vmatpush1.msra.mxu0 0.0
    %1195 = vmatprep.subr.mxu0 0.0
    %1196 = vmatpush1.msra.mxu0 0.0
    %1197 = vmatprep.subr.mxu0 0.0
    %1198 = vmatpush1.msra.mxu0 0.0
    %1199 = vmatprep.subr.mxu0 0.0
    %1200 = vmatpush1.msra.mxu0 0.0
    %1201 = vmatprep.subr.mxu0 0.0
    %1202 = vmatpush1.msra.mxu0 0.0
    %1203 = vmatprep.subr.mxu0 0.0
    %1204 = vmatpush1.msra.mxu0 0.0
    %1205 = vmatprep.subr.mxu0 0.0
    %1206 = vmatpush1.msra.mxu0 0.0
    %1207 = vmatprep.subr.mxu0 0.0
    %1208 = vmatpush1.msra.mxu0 0.0
    %1209 = vmatprep.subr.mxu0 0.0
    %1210 = vmatpush1.msra.mxu0 0.0
    %1211 = vmatprep.subr.mxu0 0.0
    %1212 = vmatpush1.msra.mxu0 0.0
    %1213 = vmatprep.subr.mxu0 0.0
    %1214 = vmatpush1.msra.mxu0 0.0
    %1215 = vmatprep.subr.mxu0 0.0
    %1216 = vmatpush1.msra.mxu0 0.0
    %1217 = vmatprep.subr.mxu0 0.0
    %1218 = vmatpush1.msra.mxu0 0.0
    %1219 = vmatprep.subr.mxu0 0.0
    %1220 = vmatpush1.msra.mxu0 0.0
    %1221 = vmatprep.subr.mxu0 0.0
    %1222 = vmatpush1.msra.mxu0 0.0
    %1223 = vmatprep.subr.mxu0 0.0
    %1224 = vmatpush1.msra.mxu0 0.0
    %1225 = vmatprep.subr.mxu0 0.0
    %1226 = vmatpush1.msra.mxu0 0.0
    %1227 = vmatprep.subr.mxu0 0.0
    %1228 = vmatpush1.msra.mxu0 0.0
    %1229 = vmatprep.subr.mxu0 0.0
    %1230 = vmatpush1.msra.mxu0 0.0
    %1231 = vmatprep.subr.mxu0 0.0
    %1232 = vmatpush1.msra.mxu0 0.0
    %1233 = vmatprep.subr.mxu0 0.0
    %1234 = vmatpush1.msra.mxu0 0.0
    %1235 = vmatprep.subr.mxu0 0.0
    %1236 = vmatpush1.msra.mxu0 0.0
    %1237 = vmatprep.subr.mxu0 0.0
    %1238 = vmatpush1.msra.mxu0 0.0
    %1239 = vmatprep.subr.mxu0 0.0
    %1240 = vmatpush1.msra.mxu0 0.0
    %1241 = vmatprep.subr.mxu0 0.0
    %1242 = vmatpush1.msra.mxu0 0.0
    %1243 = vmatprep.subr.mxu0 0.0
    %1244 = vmatpush1.msra.mxu0 0.0
    %1245 = vmatprep.subr.mxu0 0.0
    %1246 = vmatpush1.msra.mxu0 0.0
    %1247 = vmatprep.subr.mxu0 0.0
    %1248 = vmatpush1.msra.mxu0 0.0
    %1249 = vmatprep.subr.mxu0 0.0
    %1250 = vmatpush1.msra.mxu0 0.0
    %1251 = vmatprep.mubr.f32.mxu0 0.0
    %1252 = vmatmul.mubr.f32.gmra.mrb[0].mxu0 %v1185
    %v1253 = vpop.f32.mrb[0].mxu0
    %v1254 = vadd.f32 0.0, %v1253
    %v1255 = vpop.f32.mrb[0].mxu0
    %1256 = vdwg.mxu0
    %1257 = vrot.lane.b32.xlu0 %v138, 56
    %v1258 = vpop.permute.xlu0 %1257
    %v1261 = vsel %vm144, %v849, 0
    %1263 = vmatprep.subr.mxu0 0.0
    %1264 = vmatpush1.msra.mxu0 %v1258
    %1265 = vmatprep.subr.mxu0 0.0
    %1266 = vmatpush1.msra.mxu0 0.0
    %1267 = vmatprep.subr.mxu0 0.0
    %1268 = vmatpush1.msra.mxu0 0.0
    %1269 = vmatprep.subr.mxu0 0.0
    %1270 = vmatpush1.msra.mxu0 0.0
    %1271 = vmatprep.subr.mxu0 0.0
    %1272 = vmatpush1.msra.mxu0 0.0
    %1273 = vmatprep.subr.mxu0 0.0
    %1274 = vmatpush1.msra.mxu0 0.0
    %1275 = vmatprep.subr.mxu0 0.0
    %1276 = vmatpush1.msra.mxu0 0.0
    %1277 = vmatprep.subr.mxu0 0.0
    %1278 = vmatpush1.msra.mxu0 0.0
    %1279 = vmatprep.subr.mxu0 0.0
    %1280 = vmatpush1.msra.mxu0 0.0
    %1281 = vmatprep.subr.mxu0 0.0
    %1282 = vmatpush1.msra.mxu0 0.0
    %1283 = vmatprep.subr.mxu0 0.0
    %1284 = vmatpush1.msra.mxu0 0.0
    %1285 = vmatprep.subr.mxu0 0.0
    %1286 = vmatpush1.msra.mxu0 0.0
    %1287 = vmatprep.subr.mxu0 0.0
    %1288 = vmatpush1.msra.mxu0 0.0
    %1289 = vmatprep.subr.mxu0 0.0
    %1290 = vmatpush1.msra.mxu0 0.0
    %1291 = vmatprep.subr.mxu0 0.0
    %1292 = vmatpush1.msra.mxu0 0.0
    %1293 = vmatprep.subr.mxu0 0.0
    %1294 = vmatpush1.msra.mxu0 0.0
    %1295 = vmatprep.subr.mxu0 0.0
    %1296 = vmatpush1.msra.mxu0 0.0
    %1297 = vmatprep.subr.mxu0 0.0
    %1298 = vmatpush1.msra.mxu0 0.0
    %1299 = vmatprep.subr.mxu0 0.0
    %1300 = vmatpush1.msra.mxu0 0.0
    %1301 = vmatprep.subr.mxu0 0.0
    %1302 = vmatpush1.msra.mxu0 0.0
    %1303 = vmatprep.subr.mxu0 0.0
    %1304 = vmatpush1.msra.mxu0 0.0
    %1305 = vmatprep.subr.mxu0 0.0
    %1306 = vmatpush1.msra.mxu0 0.0
    %1307 = vmatprep.subr.mxu0 0.0
    %1308 = vmatpush1.msra.mxu0 0.0
    %1309 = vmatprep.subr.mxu0 0.0
    %1310 = vmatpush1.msra.mxu0 0.0
    %1311 = vmatprep.subr.mxu0 0.0
    %1312 = vmatpush1.msra.mxu0 0.0
    %1313 = vmatprep.subr.mxu0 0.0
    %1314 = vmatpush1.msra.mxu0 0.0
    %1315 = vmatprep.subr.mxu0 0.0
    %1316 = vmatpush1.msra.mxu0 0.0
    %1317 = vmatprep.subr.mxu0 0.0
    %1318 = vmatpush1.msra.mxu0 0.0
    %1319 = vmatprep.subr.mxu0 0.0
    %1320 = vmatpush1.msra.mxu0 0.0
    %1321 = vmatprep.subr.mxu0 0.0
    %1322 = vmatpush1.msra.mxu0 0.0
    %1323 = vmatprep.subr.mxu0 0.0
    %1324 = vmatpush1.msra.mxu0 0.0
    %1325 = vmatprep.subr.mxu0 0.0
    %1326 = vmatpush1.msra.mxu0 0.0
    %1327 = vmatprep.mubr.f32.mxu0 0.0
    %1328 = vmatmul.mubr.f32.gmra.mrb[0].mxu0 %v1261
    %v1329 = vpop.f32.mrb[0].mxu0
    %v1330 = vadd.f32 0.0, %v1329
    %v1331 = vpop.f32.mrb[0].mxu0
    %1332 = vdwg.mxu0
    %1333 = vrot.lane.b32.xlu0 %v138, 48
    %v1334 = vpop.permute.xlu0 %1333
    %v1337 = vsel %vm144, %v850, 0
    %1339 = vmatprep.subr.mxu0 0.0
    %1340 = vmatpush1.msra.mxu0 %v1334
    %1341 = vmatprep.subr.mxu0 0.0
    %1342 = vmatpush1.msra.mxu0 0.0
    %1343 = vmatprep.subr.mxu0 0.0
    %1344 = vmatpush1.msra.mxu0 0.0
    %1345 = vmatprep.subr.mxu0 0.0
    %1346 = vmatpush1.msra.mxu0 0.0
    %1347 = vmatprep.subr.mxu0 0.0
    %1348 = vmatpush1.msra.mxu0 0.0
    %1349 = vmatprep.subr.mxu0 0.0
    %1350 = vmatpush1.msra.mxu0 0.0
    %1351 = vmatprep.subr.mxu0 0.0
    %1352 = vmatpush1.msra.mxu0 0.0
    %1353 = vmatprep.subr.mxu0 0.0
    %1354 = vmatpush1.msra.mxu0 0.0
    %1355 = vmatprep.subr.mxu0 0.0
    %1356 = vmatpush1.msra.mxu0 0.0
    %1357 = vmatprep.subr.mxu0 0.0
    %1358 = vmatpush1.msra.mxu0 0.0
    %1359 = vmatprep.subr.mxu0 0.0
    %1360 = vmatpush1.msra.mxu0 0.0
    %1361 = vmatprep.subr.mxu0 0.0
    %1362 = vmatpush1.msra.mxu0 0.0
    %1363 = vmatprep.subr.mxu0 0.0
    %1364 = vmatpush1.msra.mxu0 0.0
    %1365 = vmatprep.subr.mxu0 0.0
    %1366 = vmatpush1.msra.mxu0 0.0
    %1367 = vmatprep.subr.mxu0 0.0
    %1368 = vmatpush1.msra.mxu0 0.0
    %1369 = vmatprep.subr.mxu0 0.0
    %1370 = vmatpush1.msra.mxu0 0.0
    %1371 = vmatprep.subr.mxu0 0.0
    %1372 = vmatpush1.msra.mxu0 0.0
    %1373 = vmatprep.subr.mxu0 0.0
    %1374 = vmatpush1.msra.mxu0 0.0
    %1375 = vmatprep.subr.mxu0 0.0
    %1376 = vmatpush1.msra.mxu0 0.0
    %1377 = vmatprep.subr.mxu0 0.0
    %1378 = vmatpush1.msra.mxu0 0.0
    %1379 = vmatprep.subr.mxu0 0.0
    %1380 = vmatpush1.msra.mxu0 0.0
    %1381 = vmatprep.subr.mxu0 0.0
    %1382 = vmatpush1.msra.mxu0 0.0
    %1383 = vmatprep.subr.mxu0 0.0
    %1384 = vmatpush1.msra.mxu0 0.0
    %1385 = vmatprep.subr.mxu0 0.0
    %1386 = vmatpush1.msra.mxu0 0.0
    %1387 = vmatprep.subr.mxu0 0.0
    %1388 = vmatpush1.msra.mxu0 0.0
    %1389 = vmatprep.subr.mxu0 0.0
    %1390 = vmatpush1.msra.mxu0 0.0
    %1391 = vmatprep.subr.mxu0 0.0
    %1392 = vmatpush1.msra.mxu0 0.0
    %1393 = vmatprep.subr.mxu0 0.0
    %1394 = vmatpush1.msra.mxu0 0.0
    %1395 = vmatprep.subr.mxu0 0.0
    %1396 = vmatpush1.msra.mxu0 0.0
    %1397 = vmatprep.subr.mxu0 0.0
    %1398 = vmatpush1.msra.mxu0 0.0
    %1399 = vmatprep.subr.mxu0 0.0
    %1400 = vmatpush1.msra.mxu0 0.0
    %1401 = vmatprep.subr.mxu0 0.0
    %1402 = vmatpush1.msra.mxu0 0.0
    %1403 = vmatprep.mubr.f32.mxu0 0.0
    %1404 = vmatmul.mubr.f32.gmra.mrb[0].mxu0 %v1337
    %v1405 = vpop.f32.mrb[0].mxu0
    %v1406 = vadd.f32 0.0, %v1405
    %v1407 = vpop.f32.mrb[0].mxu0
    %1408 = vdwg.mxu0
    %1409 = vrot.lane.b32.xlu0 %v138, 40
    %v1410 = vpop.permute.xlu0 %1409
    %v1413 = vsel %vm144, %v851, 0
    %1415 = vmatprep.subr.mxu0 0.0
    %1416 = vmatpush1.msra.mxu0 %v1410
    %1417 = vmatprep.subr.mxu0 0.0
    %1418 = vmatpush1.msra.mxu0 0.0
    %1419 = vmatprep.subr.mxu0 0.0
    %1420 = vmatpush1.msra.mxu0 0.0
    %1421 = vmatprep.subr.mxu0 0.0
    %1422 = vmatpush1.msra.mxu0 0.0
    %1423 = vmatprep.subr.mxu0 0.0
    %1424 = vmatpush1.msra.mxu0 0.0
    %1425 = vmatprep.subr.mxu0 0.0
    %1426 = vmatpush1.msra.mxu0 0.0
    %1427 = vmatprep.subr.mxu0 0.0
    %1428 = vmatpush1.msra.mxu0 0.0
    %1429 = vmatprep.subr.mxu0 0.0
    %1430 = vmatpush1.msra.mxu0 0.0
    %1431 = vmatprep.subr.mxu0 0.0
    %1432 = vmatpush1.msra.mxu0 0.0
    %1433 = vmatprep.subr.mxu0 0.0
    %1434 = vmatpush1.msra.mxu0 0.0
    %1435 = vmatprep.subr.mxu0 0.0
    %1436 = vmatpush1.msra.mxu0 0.0
    %1437 = vmatprep.subr.mxu0 0.0
    %1438 = vmatpush1.msra.mxu0 0.0
    %1439 = vmatprep.subr.mxu0 0.0
    %1440 = vmatpush1.msra.mxu0 0.0
    %1441 = vmatprep.subr.mxu0 0.0
    %1442 = vmatpush1.msra.mxu0 0.0
    %1443 = vmatprep.subr.mxu0 0.0
    %1444 = vmatpush1.msra.mxu0 0.0
    %1445 = vmatprep.subr.mxu0 0.0
    %1446 = vmatpush1.msra.mxu0 0.0
    %1447 = vmatprep.subr.mxu0 0.0
    %1448 = vmatpush1.msra.mxu0 0.0
    %1449 = vmatprep.subr.mxu0 0.0
    %1450 = vmatpush1.msra.mxu0 0.0
    %1451 = vmatprep.subr.mxu0 0.0
    %1452 = vmatpush1.msra.mxu0 0.0
    %1453 = vmatprep.subr.mxu0 0.0
    %1454 = vmatpush1.msra.mxu0 0.0
    %1455 = vmatprep.subr.mxu0 0.0
    %1456 = vmatpush1.msra.mxu0 0.0
    %1457 = vmatprep.subr.mxu0 0.0
    %1458 = vmatpush1.msra.mxu0 0.0
    %1459 = vmatprep.subr.mxu0 0.0
    %1460 = vmatpush1.msra.mxu0 0.0
    %1461 = vmatprep.subr.mxu0 0.0
    %1462 = vmatpush1.msra.mxu0 0.0
    %1463 = vmatprep.subr.mxu0 0.0
    %1464 = vmatpush1.msra.mxu0 0.0
    %1465 = vmatprep.subr.mxu0 0.0
    %1466 = vmatpush1.msra.mxu0 0.0
    %1467 = vmatprep.subr.mxu0 0.0
    %1468 = vmatpush1.msra.mxu0 0.0
    %1469 = vmatprep.subr.mxu0 0.0
    %1470 = vmatpush1.msra.mxu0 0.0
    %1471 = vmatprep.subr.mxu0 0.0
    %1472 = vmatpush1.msra.mxu0 0.0
    %1473 = vmatprep.subr.mxu0 0.0
    %1474 = vmatpush1.msra.mxu0 0.0
    %1475 = vmatprep.subr.mxu0 0.0
    %1476 = vmatpush1.msra.mxu0 0.0
    %1477 = vmatprep.subr.mxu0 0.0
    %1478 = vmatpush1.msra.mxu0 0.0
    %1479 = vmatprep.mubr.f32.mxu0 0.0
    %1480 = vmatmul.mubr.f32.gmra.mrb[0].mxu0 %v1413
    %v1481 = vpop.f32.mrb[0].mxu0
    %v1482 = vadd.f32 0.0, %v1481
    %v1483 = vpop.f32.mrb[0].mxu0
    %1484 = vdwg.mxu0
    %1486 = vrot.lane.b32.xlu0 %v1330, 8
    %v1487 = vpop.permute.xlu0 %1486
    %1490 = vrot.lane.b32.xlu0 %v1406, 16
    %v1491 = vpop.permute.xlu0 %1490
    %1494 = vrot.lane.b32.xlu0 %v1482, 24
    %v1495 = vpop.permute.xlu0 %1494
    %v1497 = vsel %vm144, %v1254, %v1487
    %v1498 = vsel %vm1177, %v1497, %v1491
    %v1499 = vsel %vm1179, %v1498, %v1495
    %1504 = vrot.lane.b32.xlu0 %v48, 32
    %v1505 = vpop.permute.xlu0 %1504
    %1506 = vrot.lane.b32.xlu0 %v49, 32
    %v1507 = vpop.permute.xlu0 %1506
    %1508 = vrot.lane.b32.xlu0 %v50, 32
    %v1509 = vpop.permute.xlu0 %1508
    %1510 = vrot.lane.b32.xlu0 %v51, 32
    %v1511 = vpop.permute.xlu0 %1510
    %1516 = vrot.lane.b32.xlu0 %v57, 32
    %v1517 = vpop.permute.xlu0 %1516
    %v1520 = vsel %vm59, %v1180, 0
    %v1523 = vsel %vm59, %v1499, 0
    %1525 = vmatprep.subr.mxu0 0.0
    %1526 = vmatpush1.msra.mxu0 %v1505
    %1527 = vmatprep.subr.mxu0 0.0
    %1528 = vmatpush1.msra.mxu0 %v1507
    %1529 = vmatprep.subr.mxu0 0.0
    %1530 = vmatpush1.msra.mxu0 %v1509
    %1531 = vmatprep.subr.mxu0 0.0
    %1532 = vmatpush1.msra.mxu0 %v1511
    %1533 = vmatprep.subr.mxu0 0.0
    %1534 = vmatpush1.msra.mxu0 0.0
    %1535 = vmatprep.subr.mxu0 0.0
    %1536 = vmatpush1.msra.mxu0 0.0
    %1537 = vmatprep.subr.mxu0 0.0
    %1538 = vmatpush1.msra.mxu0 0.0
    %1539 = vmatprep.subr.mxu0 0.0
    %1540 = vmatpush1.msra.mxu0 0.0
    %1541 = vmatprep.subr.mxu0 0.0
    %1542 = vmatpush1.msra.mxu0 0.0
    %1543 = vmatprep.subr.mxu0 0.0
    %1544 = vmatpush1.msra.mxu0 0.0
    %1545 = vmatprep.subr.mxu0 0.0
    %1546 = vmatpush1.msra.mxu0 0.0
    %1547 = vmatprep.subr.mxu0 0.0
    %1548 = vmatpush1.msra.mxu0 0.0
    %1549 = vmatprep.subr.mxu0 0.0
    %1550 = vmatpush1.msra.mxu0 0.0
    %1551 = vmatprep.subr.mxu0 0.0
    %1552 = vmatpush1.msra.mxu0 0.0
    %1553 = vmatprep.subr.mxu0 0.0
    %1554 = vmatpush1.msra.mxu0 0.0
    %1555 = vmatprep.subr.mxu0 0.0
    %1556 = vmatpush1.msra.mxu0 0.0
    %1557 = vmatprep.subr.mxu0 0.0
    %1558 = vmatpush1.msra.mxu0 0.0
    %1559 = vmatprep.subr.mxu0 0.0
    %1560 = vmatpush1.msra.mxu0 0.0
    %1561 = vmatprep.subr.mxu0 0.0
    %1562 = vmatpush1.msra.mxu0 0.0
    %1563 = vmatprep.subr.mxu0 0.0
    %1564 = vmatpush1.msra.mxu0 0.0
    %1565 = vmatprep.subr.mxu0 0.0
    %1566 = vmatpush1.msra.mxu0 0.0
    %1567 = vmatprep.subr.mxu0 0.0
    %1568 = vmatpush1.msra.mxu0 0.0
    %1569 = vmatprep.subr.mxu0 0.0
    %1570 = vmatpush1.msra.mxu0 0.0
    %1571 = vmatprep.subr.mxu0 0.0
    %1572 = vmatpush1.msra.mxu0 0.0
    %1573 = vmatprep.subr.mxu0 0.0
    %1574 = vmatpush1.msra.mxu0 0.0
    %1575 = vmatprep.subr.mxu0 0.0
    %1576 = vmatpush1.msra.mxu0 0.0
    %1577 = vmatprep.subr.mxu0 0.0
    %1578 = vmatpush1.msra.mxu0 0.0
    %1579 = vmatprep.subr.mxu0 0.0
    %1580 = vmatpush1.msra.mxu0 0.0
    %1581 = vmatprep.subr.mxu0 0.0
    %1582 = vmatpush1.msra.mxu0 0.0
    %1583 = vmatprep.subr.mxu0 0.0
    %1584 = vmatpush1.msra.mxu0 0.0
    %1585 = vmatprep.subr.mxu0 0.0
    %1586 = vmatpush1.msra.mxu0 0.0
    %1587 = vmatprep.subr.mxu0 0.0
    %1588 = vmatpush1.msra.mxu0 0.0
    %1589 = vmatprep.mubr.f32.mxu0 0.0
    %1590 = vmatmul.mubr.f32.gmra.mrb[0].mxu0 %v1520
    %v1591 = vpop.f32.mrb[0].mxu0
    %v1592 = vadd.f32 %v1517, %v1591
    %v1593 = vpop.f32.mrb[0].mxu0
    %1594 = vmatprep.mubr.f32.mxu0 0.0
    %1595 = vmatmul.mubr.f32.gmra.mrb[0].mxu0 %v1523
    %v1596 = vpop.f32.mrb[0].mxu0
    %v1597 = vadd.f32 %v1517, %v1596
    %v1598 = vpop.f32.mrb[0].mxu0
    %1599 = vdwg.mxu0
    %1600 = vst.msk [vmem:[#allocation7] sm:$0xff] %vm59, %v1592
    %1601 = vst.msk [vmem:[#allocation7 + $0x8] sm:$0xff] %vm59, %v1597
    // Predicated region
    $region22: #{tpu_custom_call.1} parent=1 // pred_check
      _
    $region23: #{tpu_custom_call.1} parent=1 // pred_check_branch
      %1603 = sbr.rel (0) target = $region25
    $region24: #{tpu_custom_call.1} parent=1 // pred_region
      %s1605 = ssub.s32 256, 256
      %1606 = vsyncadd [#allocation4], %s1605
      %s1607 = sshll.u32 [#allocation7], 4
      %s1608 = int_to_ptr.vmem [resolvable:$true] %s1607
      %1613 = dma.vmem_to_hbm [thread:$0]  %s1608, 256, %s3, [#allocation4], 128, 128, 8
    $region25: #{tpu_custom_call.1} parent=1 // pred_fallthru
      _
    // Predicated region
    $region26: #{tpu_custom_call.1} parent=1 // pred_check
      _
    $region27: #{tpu_custom_call.1} parent=1 // pred_check_branch
      %1615 = sbr.rel (0) target = $region29
    $region28: #{tpu_custom_call.1} parent=1 // pred_region
      %s1617 = ssub.s32 1024, 1024
      %1618 = vsyncadd [#allocation9], %s1617
      %s1619 = sshll.u32 [#allocation8], 4
      %s1620 = int_to_ptr.vmem [resolvable:$true] %s1619
      %1625 = dma.vmem_to_hbm [thread:$0]  %s1620, 1024, %s4, [#allocation9], 128, 128, 8
    $region29: #{tpu_custom_call.1} parent=1 // pred_fallthru
      _
    // Predicated region
    $region30: #{tpu_custom_call.1} parent=1 // pred_check
      _
    $region31: #{tpu_custom_call.1} parent=1 // pred_check_branch
      %1627 = sbr.rel (0) target = $region33
    $region32: #{tpu_custom_call.1} parent=1 // pred_region
      %1628 = dma.done [#allocation4], 256
    $region33: #{tpu_custom_call.1} parent=1 // pred_fallthru
      _
    // Predicated region
    $region34: #{tpu_custom_call.1} parent=1 // pred_check
      _
    $region35: #{tpu_custom_call.1} parent=1 // pred_check_branch
      %1630 = sbr.rel (0) target = $region37
    $region36: #{tpu_custom_call.1} parent=1 // pred_region
      %1631 = dma.done [#allocation9], 1024
    $region37: #{tpu_custom_call.1} parent=1 // pred_fallthru
      _
    %1632 = vsyncpa [#allocation3], 1
    %1633 = vsyncpa [#allocation6], 1
    %1634 = vsyncpa [#allocation4], 1
    %1635 = vsyncpa [#allocation9], 1

</llo_original>
